<compile_context>
chip_gen: v7x
topology: tpu7x:2x2x1
jax: 0.10.0
libtpu: 0.0.40
codegen_flags: <defaults>
</compile_context>

<pallas_src>
import jax
import jax.numpy as jnp
from jax.experimental import pallas as pl
from jax.experimental.pallas import tpu as pltpu


def _round_up(a: int, b: int) -> int:
    return ((a + b - 1) // b) * b


def swiglu_kernel(x_ref, w13_ref, b13_ref, w2_ref, b2_ref, o_ref, acc_ref):
    """One (token-tile i, inter-tile k) grid step of the fused SwiGLU expert.

    x_ref   : (tm, dim)    bf16
    w13_ref : (dim, 2*tn)  bf16  -- [W1[:, k-slice] | W3[:, k-slice]]
    b13_ref : (1, 2*tn)    f32   -- [b1[k-slice]    | b3[k-slice]]
    w2_ref  : (tn, dim)    bf16  -- W2[k-slice, :]
    b2_ref  : (1, dim)     f32
    o_ref   : (tm, dim)    bf16
    acc_ref : (tm, dim)    f32 VMEM accumulator over the inter reduction (axis 1).
    """
    k = pl.program_id(1)

    @pl.when(k == 0)
    def _():
        acc_ref[...] = jnp.zeros_like(acc_ref)

    x = x_ref[...]                                   # (tm, dim) bf16

    # Fused gate/up projection: one DMA stream, one MXU push sequence.
    h = jnp.dot(x, w13_ref[...], preferred_element_type=jnp.float32) + b13_ref[...]
    half = h.shape[1] // 2                           # static, multiple of 128
    h1 = h[:, :half]
    h3 = h[:, half:]

    # silu(h1) * h3 in f32 (sigmoid lowers to the EUP slot).
    g = (h1 * jax.nn.sigmoid(h1)) * h3               # (tm, tn) f32

    # Partial down-projection, accumulated in f32 scratch.
    acc_ref[...] += jnp.dot(g.astype(w2_ref.dtype), w2_ref[...],
                            preferred_element_type=jnp.float32)

    @pl.when(k == pl.num_programs(1) - 1)
    def _():
        o_ref[...] = (acc_ref[...] + b2_ref[...]).astype(o_ref.dtype)


def _vmem_capacity_bytes() -> int:
    """Per-core VMEM capacity; conservative fallback if the query fails."""
    try:
        cap = getattr(pltpu.get_tpu_info(), "vmem_capacity_bytes", None)
        if cap:
            return int(cap)
    except Exception:
        pass
    try:
        kind = jax.devices()[0].device_kind.lower()
        if "7" in kind:                     # v7x: 64 MiB / TensorCore
            return 64 * 2**20
        return 128 * 2**20                  # v5e / v6e
    except Exception:
        return 64 * 2**20                   # safest assumption


def _pick_config(T: int, dim: int, out_bytes: int):
    """Per-generation tile / VMEM-budget selection with a footprint check."""
    vmem_cap = _vmem_capacity_bytes()
    if vmem_cap >= 96 * 2**20:              # v5e / v6e (128 MiB physical)
        tm_target = 512
        vmem_limit = 100 * 2**20
    else:                                   # v7x (64 MiB physical)
        tm_target = 256
        vmem_limit = 48 * 2**20
    vmem_limit = min(vmem_limit, int(0.85 * vmem_cap))

    tn = 256
    tm = min(tm_target, _round_up(T, 16))   # 16-row alignment for packed bf16

    def footprint(tm_, tn_):
        bf = 2
        return (2 * tm_ * dim * bf          # x tiles (double-buffered)
                + 2 * dim * 2 * tn_ * bf    # [W1|W3] tiles
                + 2 * tn_ * dim * bf        # W2 tiles
                + 2 * 2 * tn_ * 4           # [b1|b3] tiles
                + 2 * dim * 4               # b2 tiles
                + 2 * tm_ * dim * out_bytes # out tiles
                + tm_ * dim * 4)            # f32 accumulator scratch

    while footprint(tm, tn) > 0.85 * vmem_limit and tm > 128:
        tm //= 2
    while footprint(tm, tn) > 0.85 * vmem_limit and tn > 128:
        tn //= 2
    return tm, tn, vmem_limit


def swiglu_mlp(x, w1, b1, w3, b3, w2, b2, *, out_dtype=jnp.bfloat16):
    """x: [T, dim]; w1/w3: [dim, inter]; w2: [inter, dim]; biases: [1, out]."""
    T, dim = x.shape
    inter = w1.shape[1]
    assert dim % 128 == 0, "dim must be a multiple of 128 (lane-dense tiles)"

    out_bytes = jnp.dtype(out_dtype).itemsize
    tm, tn, vmem_limit = _pick_config(T, dim, out_bytes)
    tn = min(tn, _round_up(inter, 128))

    inter_pad = _round_up(inter, tn)
    nk = inter_pad // tn

    # bf16 matmul operands (f32 accumulation happens in-kernel); f32 biases.
    xb = x.astype(jnp.bfloat16)
    w1b = w1.astype(jnp.bfloat16)
    w3b = w3.astype(jnp.bfloat16)
    w2b = w2.astype(jnp.bfloat16)
    b1f = b1.astype(jnp.float32).reshape(1, inter)
    b3f = b3.astype(jnp.float32).reshape(1, inter)
    b2f = b2.astype(jnp.float32).reshape(1, dim)

    if inter_pad != inter:
        pad = inter_pad - inter
        # zero-padded gate/up columns give silu(0)*0 = 0 -> no contribution.
        w1b = jnp.pad(w1b, ((0, 0), (0, pad)))
        w3b = jnp.pad(w3b, ((0, 0), (0, pad)))
        b1f = jnp.pad(b1f, ((0, 0), (0, pad)))
        b3f = jnp.pad(b3f, ((0, 0), (0, pad)))
        w2b = jnp.pad(w2b, ((0, pad), (0, 0)))

    # Per-tile interleaved fusion: column block k of w13 is [W1[:,k] | W3[:,k]].
    w13 = jnp.concatenate(
        [w1b.reshape(dim, nk, tn), w3b.reshape(dim, nk, tn)], axis=-1
    ).reshape(dim, nk * 2 * tn)
    b13 = jnp.concatenate(
        [b1f.reshape(1, nk, tn), b3f.reshape(1, nk, tn)], axis=-1
    ).reshape(1, nk * 2 * tn)

    # Token padding up to a multiple of the (16-aligned) token tile.
    t_pad = _round_up(T, tm)
    if t_pad != T:
        xb = jnp.pad(xb, ((0, t_pad - T), (0, 0)))

    grid = (t_pad // tm, nk)   # (parallel token tiles, reduction over inter)

    out = pl.pallas_call(
        swiglu_kernel,
        out_shape=jax.ShapeDtypeStruct((t_pad, dim), out_dtype),
        grid_spec=pltpu.PrefetchScalarGridSpec(
            num_scalar_prefetch=0,
            grid=grid,
            in_specs=[
                pl.BlockSpec((tm, dim), lambda i, k: (i, 0)),       # x row tile
                pl.BlockSpec((dim, 2 * tn), lambda i, k: (0, k)),   # [W1|W3][:, k]
                pl.BlockSpec((1, 2 * tn), lambda i, k: (0, k)),     # [b1|b3][k]
                pl.BlockSpec((tn, dim), lambda i, k: (k, 0)),       # W2[k, :]
                pl.BlockSpec((1, dim), lambda i, k: (0, 0)),        # b2
            ],
            out_specs=pl.BlockSpec((tm, dim), lambda i, k: (i, 0)),
            scratch_shapes=[pltpu.VMEM((tm, dim), jnp.float32)],
        ),
        compiler_params=pltpu.CompilerParams(
            dimension_semantics=("parallel", "arbitrary"),
            vmem_limit_bytes=vmem_limit,
        ),
    )(xb, w13, b13, w2b, b2f)

    return out[:T] if t_pad != T else out


def _init_linear(key, in_features, out_features, dtype=jnp.float32):
    """Deterministic init mimicking nn.Linear bounds.

    Returns W stored as (in_features, out_features) and b as (1, out_features).
    """
    kw, kb = jax.random.split(key)
    bound = 1.0 / (in_features ** 0.5)
    w = jax.random.uniform(kw, (in_features, out_features), dtype,
                           minval=-bound, maxval=bound)
    b = jax.random.uniform(kb, (1, out_features), dtype,
                           minval=-bound, maxval=bound)
    return w, b


if __name__ == "__main__":
    # Shapes consistent with ModelArgs: dim=256, inter_dim=2*dim=512.
    dim, inter_dim = 256, 512
    batch, seq = 2, 64
    tokens = batch * seq                       # 128 rows

    key = jax.random.PRNGKey(0)
    kx, k1, k2, k3 = jax.random.split(key, 4)

    x = jax.random.normal(kx, (tokens, dim), jnp.float32)
    w1, b1 = _init_linear(k1, dim, inter_dim)   # nn.Linear(dim, inter_dim)
    w2, b2 = _init_linear(k2, inter_dim, dim)   # nn.Linear(inter_dim, dim)
    w3, b3 = _init_linear(k3, dim, inter_dim)   # nn.Linear(dim, inter_dim)

    out = swiglu_mlp(x, w1, b1, w3, b3, w2, b2)
    out = jax.block_until_ready(out)

    # Pure-JAX reference with the same bf16-input / f32-accumulation casts.
    xb = x.astype(jnp.bfloat16)
    w1b, w3b, w2b = (w.astype(jnp.bfloat16) for w in (w1, w3, w2))
    h1 = jnp.dot(xb, w1b, preferred_element_type=jnp.float32) + b1
    h3 = jnp.dot(xb, w3b, preferred_element_type=jnp.float32) + b3
    g = (h1 * jax.nn.sigmoid(h1)) * h3
    ref = jnp.dot(g.astype(jnp.bfloat16), w2b,
                  preferred_element_type=jnp.float32) + b2
    ref = ref.astype(out.dtype)

    assert out.shape == (tokens, dim)
    out_f32 = out.astype(jnp.float32)
    assert bool(jnp.all(jnp.isfinite(out_f32))), "non-finite output"
    assert jnp.allclose(out_f32, ref.astype(jnp.float32),
                        atol=3e-2, rtol=3e-2), "mismatch vs reference"

    print("KERNEL_OK")
</pallas_src>

<mosaic_0001>
module attributes {stable_mosaic.version = 11 : i64} {
  func.func @swiglu_kernel(%arg0: i32, %arg1: i32, %arg2: memref<128x256xbf16, #tpu.memory_space<vmem>>, %arg3: memref<256x512xbf16, #tpu.memory_space<vmem>>, %arg4: memref<1x512xf32, #tpu.memory_space<vmem>>, %arg5: memref<256x256xbf16, #tpu.memory_space<vmem>>, %arg6: memref<1x256xf32, #tpu.memory_space<vmem>>, %arg7: memref<128x256xbf16, #tpu.memory_space<vmem>>, %arg8: memref<128x256xf32, #tpu.memory_space<vmem>>) attributes {dimension_semantics = [#tpu.dimension_semantics<parallel>, #tpu.dimension_semantics<arbitrary>], iteration_bounds = array<i64: 1, 2>, scalar_prefetch = 0 : i64, scratch_operands = 1 : i64, tpu.core_type = #tpu.core_type<tc>, window_params = [{transform_indices = @transform_0, window_bounds = array<i64: 128, 256>}, {transform_indices = @transform_1, window_bounds = array<i64: 256, 512>}, {transform_indices = @transform_2, window_bounds = array<i64: 1, 512>}, {transform_indices = @transform_3, window_bounds = array<i64: 256, 256>}, {pipeline_mode = #tpu.pipeline_mode<synchronous>, transform_indices = @transform_4, window_bounds = array<i64: 1, 256>}, {transform_indices = @transform_5, window_bounds = array<i64: 128, 256>}]} {
    %c0_i32 = arith.constant 0 : i32
    %0 = arith.cmpi eq, %arg1, %c0_i32 : i32
    %1 = arith.extui %0 : i1 to i32
    %c0_i32_0 = arith.constant 0 : i32
    %2 = arith.cmpi ne, %1, %c0_i32_0 : i32
    scf.if %2 {
      %cst_15 = arith.constant 0.000000e+00 : f32
      %27 = vector.broadcast %cst_15 : f32 to vector<128x256xf32>
      %c0_16 = arith.constant 0 : index
      %c0_17 = arith.constant 0 : index
      %28 = vector.load %arg8[%c0_16, %c0_17] : memref<128x256xf32, #tpu.memory_space<vmem>>, vector<128x256xf32>
      tpu.vector_store %arg8[%c0_16, %c0_17], %27 {strides = array<i32>} : memref<128x256xf32, #tpu.memory_space<vmem>>, vector<128x256xf32>,
    } else {
    }
    %c0 = arith.constant 0 : index
    %c0_1 = arith.constant 0 : index
    %3 = vector.load %arg2[%c0, %c0_1] : memref<128x256xbf16, #tpu.memory_space<vmem>>, vector<128x256xbf16>
    %c0_2 = arith.constant 0 : index
    %c0_3 = arith.constant 0 : index
    %4 = vector.load %arg3[%c0_2, %c0_3] : memref<256x512xbf16, #tpu.memory_space<vmem>>, vector<256x512xbf16>
    %cst = arith.constant dense<0.000000e+00> : vector<128x512xf32>
    %5 = tpu.matmul %3, %4, %cst {dimension_numbers = #tpu.dot_dimension_numbers<[1], [0], [0], [1], [0, 0, 1, 1], [], []>} : vector<128x256xbf16>, vector<256x512xbf16>, vector<128x512xf32> -> vector<128x512xf32>
    %c0_4 = arith.constant 0 : index
    %c0_5 = arith.constant 0 : index
    %6 = vector.load %arg4[%c0_4, %c0_5] : memref<1x512xf32, #tpu.memory_space<vmem>>, vector<1x512xf32>
    %7 = vector.broadcast %6 : vector<1x512xf32> to vector<128x512xf32>
    %8 = arith.addf %5, %7 : vector<128x512xf32>
    %9 = vector.extract_strided_slice %8 {offsets = [0, 0], sizes = [128, 256], strides = [1, 1]} : vector<128x512xf32> to vector<128x256xf32>
    %10 = vector.extract_strided_slice %8 {offsets = [0, 256], sizes = [128, 256], strides = [1, 1]} : vector<128x512xf32> to vector<128x256xf32>
    %11 = arith.negf %9 : vector<128x256xf32>
    %12 = math.exp %11 : vector<128x256xf32>
    %cst_6 = arith.constant 1.000000e+00 : f32
    %13 = vector.broadcast %cst_6 : f32 to vector<128x256xf32>
    %14 = arith.addf %13, %12 : vector<128x256xf32>
    %15 = arith.divf %13, %14 : vector<128x256xf32>
    %16 = arith.mulf %9, %15 : vector<128x256xf32>
    %17 = arith.mulf %16, %10 : vector<128x256xf32>
    %c0_7 = arith.constant 0 : index
    %c0_8 = arith.constant 0 : index
    %18 = vector.load %arg8[%c0_7, %c0_8] : memref<128x256xf32, #tpu.memory_space<vmem>>, vector<128x256xf32>
    %19 = arith.truncf %17 : vector<128x256xf32> to vector<128x256xbf16>
    %c0_9 = arith.constant 0 : index
    %c0_10 = arith.constant 0 : index
    %20 = vector.load %arg5[%c0_9, %c0_10] : memref<256x256xbf16, #tpu.memory_space<vmem>>, vector<256x256xbf16>
    %cst_11 = arith.constant dense<0.000000e+00> : vector<128x256xf32>
    %21 = tpu.matmul %19, %20, %cst_11 {dimension_numbers = #tpu.dot_dimension_numbers<[1], [0], [0], [1], [0, 0, 1, 1], [], []>} : vector<128x256xbf16>, vector<256x256xbf16>, vector<128x256xf32> -> vector<128x256xf32>
    %22 = arith.addf %18, %21 : vector<128x256xf32>
    %c0_12 = arith.constant 0 : index
    %c0_13 = arith.constant 0 : index
    %23 = vector.load %arg8[%c0_12, %c0_13] : memref<128x256xf32, #tpu.memory_space<vmem>>, vector<128x256xf32>
    tpu.vector_store %arg8[%c0_12, %c0_13], %22 {strides = array<i32>} : memref<128x256xf32, #tpu.memory_space<vmem>>, vector<128x256xf32>,
    %c1_i32 = arith.constant 1 : i32
    %24 = arith.cmpi eq, %arg1, %c1_i32 : i32
    %25 = arith.extui %24 : i1 to i32
    %c0_i32_14 = arith.constant 0 : i32
    %26 = arith.cmpi ne, %25, %c0_i32_14 : i32
    scf.if %26 {
      %c0_15 = arith.constant 0 : index
      %c0_16 = arith.constant 0 : index
      %27 = vector.load %arg8[%c0_15, %c0_16] : memref<128x256xf32, #tpu.memory_space<vmem>>, vector<128x256xf32>
      %c0_17 = arith.constant 0 : index
      %c0_18 = arith.constant 0 : index
      %28 = vector.load %arg6[%c0_17, %c0_18] : memref<1x256xf32, #tpu.memory_space<vmem>>, vector<1x256xf32>
      %29 = vector.broadcast %28 : vector<1x256xf32> to vector<128x256xf32>
      %30 = arith.addf %27, %29 : vector<128x256xf32>
      %31 = arith.truncf %30 : vector<128x256xf32> to vector<128x256xbf16>
      %c0_19 = arith.constant 0 : index
      %c0_20 = arith.constant 0 : index
      %32 = vector.load %arg7[%c0_19, %c0_20] : memref<128x256xbf16, #tpu.memory_space<vmem>>, vector<128x256xbf16>
      tpu.vector_store %arg7[%c0_19, %c0_20], %31 {strides = array<i32>} : memref<128x256xbf16, #tpu.memory_space<vmem>>, vector<128x256xbf16>,
    } else {
    }
    return
  }
  func.func @transform_0(%arg0: i32, %arg1: i32) -> (i32, i32) {
    %c0_i32 = arith.constant 0 : i32
    %c0_i32_0 = arith.constant 0 : i32
    return %arg0, %c0_i32 : i32, i32
  }
  func.func @transform_1(%arg0: i32, %arg1: i32) -> (i32, i32) {
    %c0_i32 = arith.constant 0 : i32
    %c0_i32_0 = arith.constant 0 : i32
    return %c0_i32, %arg1 : i32, i32
  }
  func.func @transform_2(%arg0: i32, %arg1: i32) -> (i32, i32) {
    %c0_i32 = arith.constant 0 : i32
    %c0_i32_0 = arith.constant 0 : i32
    return %c0_i32, %arg1 : i32, i32
  }
  func.func @transform_3(%arg0: i32, %arg1: i32) -> (i32, i32) {
    %c0_i32 = arith.constant 0 : i32
    %c0_i32_0 = arith.constant 0 : i32
    return %arg1, %c0_i32 : i32, i32
  }
  func.func @transform_4(%arg0: i32, %arg1: i32) -> (i32, i32) {
    %c0_i32 = arith.constant 0 : i32
    %c0_i32_0 = arith.constant 0 : i32
    %c0_i32_1 = arith.constant 0 : i32
    return %c0_i32, %c0_i32_0 : i32, i32
  }
  func.func @transform_5(%arg0: i32, %arg1: i32) -> (i32, i32) {
    %c0_i32 = arith.constant 0 : i32
    %c0_i32_0 = arith.constant 0 : i32
    return %arg0, %c0_i32 : i32, i32
  }
}

</mosaic_0001>

<llo_original>
// kernel: tpu_custom_call.1
$region0: #{tpu_custom_call.1}
  #allocation0 [shape = 'u32[]', space=smem, size = 0x4, offset = 0x4, fixed_abs, tag = 'smem constant byte address 0x4 - core index']
  #allocation1 [shape = 'u32[144,128]{1,0:T(1,128)}', space=vmem, size = 0x12000, scoped, tag = 'internal scratch']
  #allocation2 [shape = 'f32[128,256]{1,0:T(8,128)}', space=vmem, size = 0x20000, scoped, tag = 'scratch operand']
  %s0 = inlined_call_operand.hbm [shape: bf16[128,256], index: 0, kind: input, shape index: {}]
  %s1 = inlined_call_operand.hbm [shape: bf16[256,1024], index: 1, kind: input, shape index: {}]
  %s2 = inlined_call_operand.hbm [shape: f32[1,1024], index: 2, kind: input, shape index: {}]
  %s3 = inlined_call_operand.hbm [shape: bf16[512,256], index: 3, kind: input, shape index: {}]
  %s4 = inlined_call_operand.hbm [shape: f32[1,256], index: 4, kind: input, shape index: {}]
  %s5 = inlined_call_operand.hbm [shape: bf16[128,256], index: 5, kind: output, shape index: {}]
  %s6 = sld [smem:[#allocation0]]
  $region81: #{tpu_custom_call.1} parent=0
    _
  %s8 = ssub.s32 1, %s6
  %s9 = scalar_select 0, %s8, %s6
  $region1: #{tpu_custom_call.1} parent=0
    #allocation3 [shape = 'u8[65536]{0}', space=vmem, size = 0x10000, scoped, tag = 'input window, operand 0, single buffered']
    #allocation4 [shape = 's32[2]{0}', space=sflag, size = 0x8, scoped, tag = 'scoped memory for tpu_custom_call.1']
    #allocation5 [shape = 's32[2]{0}', space=sflag, size = 0x8, scoped, tag = 'scoped memory for tpu_custom_call.1']
    #allocation6 [shape = 'u8[524288]{0}', space=vmem, size = 0x80000, scoped, tag = 'input window, operand 1']
    #allocation7 [shape = 's32[2]{0}', space=sflag, size = 0x8, scoped, tag = 'scoped memory for tpu_custom_call.1']
    #allocation8 [shape = 'u8[4096]{0}', space=vmem, size = 0x1000, scoped, tag = 'input window, operand 2']
    #allocation9 [shape = 'u8[262144]{0}', space=vmem, size = 0x40000, scoped, tag = 'input window, operand 3']
    #allocation10 [shape = 's32[2]{0}', space=sflag, size = 0x8, scoped, tag = 'scoped memory for tpu_custom_call.1']
    #allocation11 [shape = 'u8[1024]{0}', space=vmem, size = 0x400, scoped, tag = 'input window, operand 4, single buffered']
    #allocation12 [shape = 'u8[65536]{0}', space=vmem, size = 0x10000, scoped, tag = 'output window, operand 0, single buffered']
    %10 = vsyncpa [#allocation4], 0
    %11 = vsyncpa [#allocation7], 0
    %s12 = scalar_lea.sflag [#allocation7], 1
    %13 = vsyncpa %s12, 0
    %14 = vsyncpa [#allocation10], 0
    %s15 = scalar_lea.sflag [#allocation10], 1
    %16 = vsyncpa %s15, 0
    %17 = vsyncpa [#allocation5], 0
    loop: start=0, step=1, limit=4
    $region2: #{tpu_custom_call.1} parent=1 // loop_pre_header
      _
    $region3: #{tpu_custom_call.1} parent=1 // loop_header
      %s19 = sphi 0, %s23
      %p20 = scmp.ge.s32.totalorder %s19, 4
      %s26 = sphi 0, %s38
      %s27 = sphi 0, %s34
      %s28 = sphi 0, %s26
      %s29 = sphi 0, %s27
      %s30 = sphi 0, %s28
      %s31 = sphi 0, %s29
      %s41 = sphi 0, %s43
      %s44 = sphi 0, %s41
      %s45 = sphi 0, %s44
      %s61 = sphi 0, %s45
      %s67 = sphi 0, %s69
      %s70 = sphi 0, %s67
      %s71 = sphi 0, %s70
      %s87 = sphi 0, %s71
      %s93 = sphi 0, %s95
      %s96 = sphi 0, %s93
      %s97 = sphi 0, %s96
      %s113 = sphi 0, %s97
      %s119 = sphi 0, %s121
      %s122 = sphi 0, %s119
      %s123 = sphi 0, %s122
      %s139 = sphi 0, %s123
      %s143 = sphi 0, %s143
      %s145 = sphi 0, %s143
      %s146 = sphi 0, %s145
      %s160 = sphi 0, %s146
      %s166 = sphi 0, %s168
      %s169 = sphi 0, %s166
      %s170 = sphi 0, %s169
      %s186 = sphi 0, %s170
    $region4: #{tpu_custom_call.1} parent=1 // loop_header_branch
      %22 = sbr.rel (%p20) target = $region8
    $region5: #{tpu_custom_call.1} parent=1 // loop_body
      %s24 = ssub.s32 %s19, 1
      %s25 = ssub.s32 %s19, 2
      %s32 = sadd.s32 1, %s27
      %p33 = scmp.ge.s32.totalorder %s32, 2
      %s34 = scalar_select %p33, 0, %s32
      %s35 = sadd.s32 1, %s26
      %s36 = scalar_select %p33, %s35, %s26
      %p37 = scmp.ge.s32.totalorder %s36, 1
      %s38 = scalar_select %p37, 0, %s36
      %s39 = ssub.s32 %s26, %s38
      %p40 = scmp.eq.s32.totalorder %s39, 0
      %s42 = sadd.s32 %s41, 1
      %s43 = scalar_select %p40, %s41, %s42
      %p46 = pneg %p40
      %p47 = scmp.eq.s32.totalorder %s19, 1
      %p48 = por %p46, %p47
      %p49 = scmp.ne.s32.totalorder %s41, %s44
      %p50 = scmp.eq.s32.totalorder %s19, 0
      %p51 = por %p49, %p50
      %p52 = scmp.ne.s32.totalorder %s41, %s44
      %p53 = scmp.eq.s32.totalorder %s24, 1
      %p54 = por %p52, %p53
      %p55 = scmp.ne.s32.totalorder %s44, %s45
      %p56 = scmp.eq.s32.totalorder %s24, 0
      %p57 = por %p55, %p56
      %p58 = scmp.ne.s32.totalorder %s44, %s45
      %p59 = scmp.eq.s32.totalorder %s25, 1
      %p60 = por %p58, %p59
      %p62 = scmp.ne.s32.totalorder %s45, %s61
      %p63 = scmp.eq.s32.totalorder %s25, 0
      %p64 = por %p62, %p63
      %s65 = ssub.s32 %s27, %s34
      %p66 = scmp.eq.s32.totalorder %s65, 0
      %s68 = sadd.s32 %s67, 1
      %s69 = scalar_select %p66, %s67, %s68
      %p72 = pneg %p66
      %p73 = scmp.eq.s32.totalorder %s19, 1
      %p74 = por %p72, %p73
      %p75 = scmp.ne.s32.totalorder %s67, %s70
      %p76 = scmp.eq.s32.totalorder %s19, 0
      %p77 = por %p75, %p76
      %p78 = scmp.ne.s32.totalorder %s67, %s70
      %p79 = scmp.eq.s32.totalorder %s24, 1
      %p80 = por %p78, %p79
      %p81 = scmp.ne.s32.totalorder %s70, %s71
      %p82 = scmp.eq.s32.totalorder %s24, 0
      %p83 = por %p81, %p82
      %p84 = scmp.ne.s32.totalorder %s70, %s71
      %p85 = scmp.eq.s32.totalorder %s25, 1
      %p86 = por %p84, %p85
      %p88 = scmp.ne.s32.totalorder %s71, %s87
      %p89 = scmp.eq.s32.totalorder %s25, 0
      %p90 = por %p88, %p89
      %s91 = ssub.s32 %s27, %s34
      %p92 = scmp.eq.s32.totalorder %s91, 0
      %s94 = sadd.s32 %s93, 1
      %s95 = scalar_select %p92, %s93, %s94
      %p98 = pneg %p92
      %p99 = scmp.eq.s32.totalorder %s19, 1
      %p100 = por %p98, %p99
      %p101 = scmp.ne.s32.totalorder %s93, %s96
      %p102 = scmp.eq.s32.totalorder %s19, 0
      %p103 = por %p101, %p102
      %p104 = scmp.ne.s32.totalorder %s93, %s96
      %p105 = scmp.eq.s32.totalorder %s24, 1
      %p106 = por %p104, %p105
      %p107 = scmp.ne.s32.totalorder %s96, %s97
      %p108 = scmp.eq.s32.totalorder %s24, 0
      %p109 = por %p107, %p108
      %p110 = scmp.ne.s32.totalorder %s96, %s97
      %p111 = scmp.eq.s32.totalorder %s25, 1
      %p112 = por %p110, %p111
      %p114 = scmp.ne.s32.totalorder %s97, %s113
      %p115 = scmp.eq.s32.totalorder %s25, 0
      %p116 = por %p114, %p115
      %s117 = ssub.s32 %s27, %s34
      %p118 = scmp.eq.s32.totalorder %s117, 0
      %s120 = sadd.s32 %s119, 1
      %s121 = scalar_select %p118, %s119, %s120
      %p124 = pneg %p118
      %p125 = scmp.eq.s32.totalorder %s19, 1
      %p126 = por %p124, %p125
      %p127 = scmp.ne.s32.totalorder %s119, %s122
      %p128 = scmp.eq.s32.totalorder %s19, 0
      %p129 = por %p127, %p128
      %p130 = scmp.ne.s32.totalorder %s119, %s122
      %p131 = scmp.eq.s32.totalorder %s24, 1
      %p132 = por %p130, %p131
      %p133 = scmp.ne.s32.totalorder %s122, %s123
      %p134 = scmp.eq.s32.totalorder %s24, 0
      %p135 = por %p133, %p134
      %p136 = scmp.ne.s32.totalorder %s122, %s123
      %p137 = scmp.eq.s32.totalorder %s25, 1
      %p138 = por %p136, %p137
      %p140 = scmp.ne.s32.totalorder %s123, %s139
      %p141 = scmp.eq.s32.totalorder %s25, 0
      %p142 = por %p140, %p141
      %s144 = sadd.s32 %s143, 1
      %p147 = scmp.eq.s32.totalorder %s19, 1
      %p148 = scmp.ne.s32.totalorder %s143, %s145
      %p149 = scmp.eq.s32.totalorder %s19, 0
      %p150 = por %p148, %p149
      %p151 = scmp.ne.s32.totalorder %s143, %s145
      %p152 = scmp.eq.s32.totalorder %s24, 1
      %p153 = por %p151, %p152
      %p154 = scmp.ne.s32.totalorder %s145, %s146
      %p155 = scmp.eq.s32.totalorder %s24, 0
      %p156 = por %p154, %p155
      %p157 = scmp.ne.s32.totalorder %s145, %s146
      %p158 = scmp.eq.s32.totalorder %s25, 1
      %p159 = por %p157, %p158
      %p161 = scmp.ne.s32.totalorder %s146, %s160
      %p162 = scmp.eq.s32.totalorder %s25, 0
      %p163 = por %p161, %p162
      %s164 = ssub.s32 %s26, %s38
      %p165 = scmp.eq.s32.totalorder %s164, 0
      %s167 = sadd.s32 %s166, 1
      %s168 = scalar_select %p165, %s166, %s167
      %p171 = pneg %p165
      %p172 = scmp.eq.s32.totalorder %s19, 1
      %p173 = por %p171, %p172
      %p174 = scmp.ne.s32.totalorder %s166, %s169
      %p175 = scmp.eq.s32.totalorder %s19, 0
      %p176 = por %p174, %p175
      %p177 = scmp.ne.s32.totalorder %s166, %s169
      %p178 = scmp.eq.s32.totalorder %s24, 1
      %p179 = por %p177, %p178
      %p180 = scmp.ne.s32.totalorder %s169, %s170
      %p181 = scmp.eq.s32.totalorder %s24, 0
      %p182 = por %p180, %p181
      %p183 = scmp.ne.s32.totalorder %s169, %s170
      %p184 = scmp.eq.s32.totalorder %s25, 1
      %p185 = por %p183, %p184
      %p187 = scmp.ne.s32.totalorder %s170, %s186
      %p188 = scmp.eq.s32.totalorder %s25, 0
      %p189 = por %p187, %p188
      %p190 = scmp.le.s32.totalorder 1, %s19
      %p191 = scmp.lt.s32.totalorder %s19, 3
      %p192 = pnand %p190, %p191
      %p193 = pneg %p192
      // Predicated region
      $region9: #{tpu_custom_call.1} parent=5 // pred_check
        _
      $region10: #{tpu_custom_call.1} parent=5 // pred_check_branch
        %195 = sbr.rel (%p192) target = $region12
      $region11: #{tpu_custom_call.1} parent=5 // pred_region
        %s196 = ssub.s32 %s19, 1
        // Predicated region
        $region13: #{tpu_custom_call.1} parent=11 // pred_check
          %p197 = pneg %p57
        $region14: #{tpu_custom_call.1} parent=11 // pred_check_branch
          %199 = sbr.rel (%p197) target = $region16
        $region15: #{tpu_custom_call.1} parent=11 // pred_region
          %s200 = smul.u32 16, %s28
          %s202 = ssub.s32 2048, 2048
          %203 = vsyncadd [#allocation4], %s202
          %s204 = smul.addr %s200, 2
          %s205 = smul.addr %s204, 64
          %s206 = scalar_lea.hbm %s0, %s205
          %s207 = sshll.u32 [#allocation3], 4
          %s208 = int_to_ptr.vmem [resolvable:$true] %s207
          %213 = dma.hbm_to_vmem [thread:$0]  %s206, 2048, %s208, [#allocation4], 128, 128, 8
        $region16: #{tpu_custom_call.1} parent=11 // pred_fallthru
          _
        // Predicated region
        $region17: #{tpu_custom_call.1} parent=11 // pred_check
          %p214 = pneg %p156
        $region18: #{tpu_custom_call.1} parent=11 // pred_check_branch
          %216 = sbr.rel (%p214) target = $region20
        $region19: #{tpu_custom_call.1} parent=11 // pred_region
          %s218 = ssub.s32 32, 32
          %219 = vsyncadd [#allocation10], %s218
          %s221 = sshll.u32 [#allocation11], 4
          %s222 = int_to_ptr.vmem [resolvable:$true] %s221
          %224 = dma.hbm_to_vmem [thread:$0]  %s4, 32, %s222, [#allocation10]
        $region20: #{tpu_custom_call.1} parent=11 // pred_fallthru
          _
      $region12: #{tpu_custom_call.1} parent=5 // pred_fallthru
        _
      %p225 = scmp.lt.s32.totalorder %s19, 2
      // Predicated region
      $region21: #{tpu_custom_call.1} parent=5 // pred_check
        %p226 = pneg %p225
      $region22: #{tpu_custom_call.1} parent=5 // pred_check_branch
        %228 = sbr.rel (%p226) target = $region24
      $region23: #{tpu_custom_call.1} parent=5 // pred_region
        // Predicated region
        $region25: #{tpu_custom_call.1} parent=23 // pred_check
          %p229 = pneg %p77
        $region26: #{tpu_custom_call.1} parent=23 // pred_check_branch
          %231 = sbr.rel (%p229) target = $region28
        $region27: #{tpu_custom_call.1} parent=23 // pred_region
          %s232 = sand.u32 %s19, 1
          %s233 = scalar_lea.sflag [#allocation7], %s232
          %s234 = sand.u32 %s67, 1
          %s235 = smul.addr %s234, 512
          %s236 = scalar_lea.vmem [#allocation6], %s235
          %s237 = smul.u32 4, %s27
          %s239 = ssub.s32 8192, 8192
          %240 = vsyncadd %s233, %s239
          %s241 = smul.addr %s237, 64
          %s242 = scalar_lea.hbm %s1, %s241
          %s243 = sshll.u32 %s236, 4
          %s244 = int_to_ptr.vmem [resolvable:$true] %s243
          %249 = dma.hbm_to_vmem [thread:$0]  %s242, 8192, %s244, %s233, 512, 256, 16
        $region28: #{tpu_custom_call.1} parent=23 // pred_fallthru
          _
        // Predicated region
        $region29: #{tpu_custom_call.1} parent=23 // pred_check
          %p250 = pneg %p103
        $region30: #{tpu_custom_call.1} parent=23 // pred_check_branch
          %252 = sbr.rel (%p250) target = $region32
        $region31: #{tpu_custom_call.1} parent=23 // pred_region
          %s253 = sand.u32 %s19, 1
          %s254 = scalar_lea.sflag [#allocation7], %s253
          %s255 = sand.u32 %s93, 1
          %s256 = smul.addr %s255, 4
          %s257 = scalar_lea.vmem [#allocation8], %s256
          %s258 = smul.u32 4, %s27
          %s260 = ssub.s32 64, 64
          %261 = vsyncadd %s254, %s260
          %s262 = smul.addr %s258, 16
          %s263 = scalar_lea.hbm %s2, %s262
          %s265 = sshll.u32 %s257, 4
          %s266 = int_to_ptr.vmem [resolvable:$true] %s265
          %268 = dma.hbm_to_vmem [thread:$0]  %s263, 64, %s266, %s254
        $region32: #{tpu_custom_call.1} parent=23 // pred_fallthru
          _
        // Predicated region
        $region33: #{tpu_custom_call.1} parent=23 // pred_check
          %p269 = pneg %p129
        $region34: #{tpu_custom_call.1} parent=23 // pred_check_branch
          %271 = sbr.rel (%p269) target = $region36
        $region35: #{tpu_custom_call.1} parent=23 // pred_region
          %s272 = sand.u32 %s19, 1
          %s273 = scalar_lea.sflag [#allocation10], %s272
          %s274 = sand.u32 %s119, 1
          %s275 = smul.addr %s274, 256
          %s276 = scalar_lea.vmem [#allocation9], %s275
          %s277 = smul.u32 32, %s27
          %s279 = ssub.s32 4096, 4096
          %280 = vsyncadd %s273, %s279
          %s281 = smul.addr %s277, 2
          %s282 = smul.addr %s281, 64
          %s283 = scalar_lea.hbm %s3, %s282
          %s284 = sshll.u32 %s276, 4
          %s285 = int_to_ptr.vmem [resolvable:$true] %s284
          %290 = dma.hbm_to_vmem [thread:$0]  %s283, 4096, %s285, %s273, 128, 128, 8
        $region36: #{tpu_custom_call.1} parent=23 // pred_fallthru
          _
      $region24: #{tpu_custom_call.1} parent=5 // pred_fallthru
        _
      %p291 = scmp.le.s32.totalorder 1, %s19
      %p292 = scmp.lt.s32.totalorder %s19, 3
      %p293 = pnand %p291, %p292
      %p294 = pneg %p293
      // Predicated region
      $region37: #{tpu_custom_call.1} parent=5 // pred_check
        _
      $region38: #{tpu_custom_call.1} parent=5 // pred_check_branch
        %296 = sbr.rel (%p293) target = $region40
      $region39: #{tpu_custom_call.1} parent=5 // pred_region
        %s297 = ssub.s32 %s19, 1
        // Predicated region
        $region41: #{tpu_custom_call.1} parent=39 // pred_check
          %p298 = pneg %p57
        $region42: #{tpu_custom_call.1} parent=39 // pred_check_branch
          %300 = sbr.rel (%p298) target = $region44
        $region43: #{tpu_custom_call.1} parent=39 // pred_region
          %301 = dma.done [#allocation4], 2048
        $region44: #{tpu_custom_call.1} parent=39 // pred_fallthru
          _
        %s302 = sand.u32 %s24, 1
        %s303 = scalar_lea.sflag [#allocation7], %s302
        %s304 = sand.u32 %s70, 1
        %s305 = smul.addr %s304, 512
        %s306 = scalar_lea.vmem [#allocation6], %s305
        // Predicated region
        $region45: #{tpu_custom_call.1} parent=39 // pred_check
          %p307 = pneg %p83
        $region46: #{tpu_custom_call.1} parent=39 // pred_check_branch
          %309 = sbr.rel (%p307) target = $region48
        $region47: #{tpu_custom_call.1} parent=39 // pred_region
          %310 = dma.done %s303, 8192
        $region48: #{tpu_custom_call.1} parent=39 // pred_fallthru
          _
        %s311 = sand.u32 %s24, 1
        %s312 = scalar_lea.sflag [#allocation7], %s311
        %s313 = sand.u32 %s96, 1
        %s314 = smul.addr %s313, 4
        %s315 = scalar_lea.vmem [#allocation8], %s314
        // Predicated region
        $region49: #{tpu_custom_call.1} parent=39 // pred_check
          %p316 = pneg %p109
        $region50: #{tpu_custom_call.1} parent=39 // pred_check_branch
          %318 = sbr.rel (%p316) target = $region52
        $region51: #{tpu_custom_call.1} parent=39 // pred_region
          %319 = dma.done %s312, 64
        $region52: #{tpu_custom_call.1} parent=39 // pred_fallthru
          _
        %s320 = sand.u32 %s24, 1
        %s321 = scalar_lea.sflag [#allocation10], %s320
        %s322 = sand.u32 %s122, 1
        %s323 = smul.addr %s322, 256
        %s324 = scalar_lea.vmem [#allocation9], %s323
        // Predicated region
        $region53: #{tpu_custom_call.1} parent=39 // pred_check
          %p325 = pneg %p135
        $region54: #{tpu_custom_call.1} parent=39 // pred_check_branch
          %327 = sbr.rel (%p325) target = $region56
        $region55: #{tpu_custom_call.1} parent=39 // pred_region
          %328 = dma.done %s321, 4096
        $region56: #{tpu_custom_call.1} parent=39 // pred_fallthru
          _
        // Predicated region
        $region57: #{tpu_custom_call.1} parent=39 // pred_check
          %p329 = pneg %p156
        $region58: #{tpu_custom_call.1} parent=39 // pred_check_branch
          %331 = sbr.rel (%p329) target = $region60
        $region59: #{tpu_custom_call.1} parent=39 // pred_region
          %332 = dma.done [#allocation10], 32
        $region60: #{tpu_custom_call.1} parent=39 // pred_fallthru
          _
        %p333 = pneg %p57
        %p334 = pneg %p54
        %s335 = sand.u32 %s24, 1
        %s336 = scalar_lea.sflag [#allocation7], %s335
        %s337 = sand.u32 %s70, 1
        %s338 = smul.addr %s337, 512
        %s339 = scalar_lea.vmem [#allocation6], %s338
        %p340 = pneg %p83
        %p341 = pneg %p80
        %s342 = sand.u32 %s24, 1
        %s343 = scalar_lea.sflag [#allocation7], %s342
        %s344 = sand.u32 %s96, 1
        %s345 = smul.addr %s344, 4
        %s346 = scalar_lea.vmem [#allocation8], %s345
        %p347 = pneg %p109
        %p348 = pneg %p106
        %s349 = sand.u32 %s24, 1
        %s350 = scalar_lea.sflag [#allocation10], %s349
        %s351 = sand.u32 %s122, 1
        %s352 = smul.addr %s351, 256
        %s353 = scalar_lea.vmem [#allocation9], %s352
        %p354 = pneg %p135
        %p355 = pneg %p132
        %p356 = pneg %p156
        %p357 = pneg %p153
        %p358 = pneg %p182
        %p359 = pneg %p179
        %s360 = smul.u32 16, %s28
        %s361 = smul.u32 4, %s29
        %s362 = smul.u32 4, %s29
        %s363 = smul.u32 32, %s29
        %s364 = smul.u32 16, %s28
        %p365 = scmp.eq.s32.totalorder %s29, 0
        // Predicated region
        $region61: #{tpu_custom_call.1} parent=39 // pred_check
          %p366 = pneg %p365
        $region62: #{tpu_custom_call.1} parent=39 // pred_check_branch
          %368 = sbr.rel (%p366) target = $region64
        $region63: #{tpu_custom_call.1} parent=39 // pred_region
          %369 = vst [vmem:[#allocation2] sm:$0xff] 0.0
          %370 = vst [vmem:[#allocation2 + $0x8] sm:$0xff] 0.0
          %371 = vst [vmem:[#allocation2 + $0x10] sm:$0xff] 0.0
          %372 = vst [vmem:[#allocation2 + $0x18] sm:$0xff] 0.0
          %373 = vst [vmem:[#allocation2 + $0x20] sm:$0xff] 0.0
          %374 = vst [vmem:[#allocation2 + $0x28] sm:$0xff] 0.0
          %375 = vst [vmem:[#allocation2 + $0x30] sm:$0xff] 0.0
          %376 = vst [vmem:[#allocation2 + $0x38] sm:$0xff] 0.0
          %377 = vst [vmem:[#allocation2 + $0x40] sm:$0xff] 0.0
          %378 = vst [vmem:[#allocation2 + $0x48] sm:$0xff] 0.0
          %379 = vst [vmem:[#allocation2 + $0x50] sm:$0xff] 0.0
          %380 = vst [vmem:[#allocation2 + $0x58] sm:$0xff] 0.0
          %381 = vst [vmem:[#allocation2 + $0x60] sm:$0xff] 0.0
          %382 = vst [vmem:[#allocation2 + $0x68] sm:$0xff] 0.0
          %383 = vst [vmem:[#allocation2 + $0x70] sm:$0xff] 0.0
          %384 = vst [vmem:[#allocation2 + $0x78] sm:$0xff] 0.0
          %385 = vst [vmem:[#allocation2 + $0x80] sm:$0xff] 0.0
          %386 = vst [vmem:[#allocation2 + $0x88] sm:$0xff] 0.0
          %387 = vst [vmem:[#allocation2 + $0x90] sm:$0xff] 0.0
          %388 = vst [vmem:[#allocation2 + $0x98] sm:$0xff] 0.0
          %389 = vst [vmem:[#allocation2 + $0xa0] sm:$0xff] 0.0
          %390 = vst [vmem:[#allocation2 + $0xa8] sm:$0xff] 0.0
          %391 = vst [vmem:[#allocation2 + $0xb0] sm:$0xff] 0.0
          %392 = vst [vmem:[#allocation2 + $0xb8] sm:$0xff] 0.0
          %393 = vst [vmem:[#allocation2 + $0xc0] sm:$0xff] 0.0
          %394 = vst [vmem:[#allocation2 + $0xc8] sm:$0xff] 0.0
          %395 = vst [vmem:[#allocation2 + $0xd0] sm:$0xff] 0.0
          %396 = vst [vmem:[#allocation2 + $0xd8] sm:$0xff] 0.0
          %397 = vst [vmem:[#allocation2 + $0xe0] sm:$0xff] 0.0
          %398 = vst [vmem:[#allocation2 + $0xe8] sm:$0xff] 0.0
          %399 = vst [vmem:[#allocation2 + $0xf0] sm:$0xff] 0.0
          %400 = vst [vmem:[#allocation2 + $0xf8] sm:$0xff] 0.0
        $region64: #{tpu_custom_call.1} parent=39 // pred_fallthru
          _
        %v401 = vld [vmem:[#allocation3] sm:$0xff]
        %v402 = vld [vmem:[#allocation3 + $0x8] sm:$0xff]
        %v403 = vld [vmem:[#allocation3 + $0x10] sm:$0xff]
        %v404 = vld [vmem:[#allocation3 + $0x18] sm:$0xff]
        %v405 = vld [vmem:[#allocation3 + $0x20] sm:$0xff]
        %v406 = vld [vmem:[#allocation3 + $0x28] sm:$0xff]
        %v407 = vld [vmem:[#allocation3 + $0x30] sm:$0xff]
        %v408 = vld [vmem:[#allocation3 + $0x38] sm:$0xff]
        %v409 = vld [vmem:[#allocation3 + $0x40] sm:$0xff]
        %v410 = vld [vmem:[#allocation3 + $0x48] sm:$0xff]
        %v411 = vld [vmem:[#allocation3 + $0x50] sm:$0xff]
        %v412 = vld [vmem:[#allocation3 + $0x58] sm:$0xff]
        %v413 = vld [vmem:[#allocation3 + $0x60] sm:$0xff]
        %v414 = vld [vmem:[#allocation3 + $0x68] sm:$0xff]
        %v415 = vld [vmem:[#allocation3 + $0x70] sm:$0xff]
        %v416 = vld [vmem:[#allocation3 + $0x78] sm:$0xff]
        %v417 = vld [vmem:[%s306] sm:$0xff]
        %v418 = vld [vmem:[%s306 + $0x8] sm:$0xff]
        %v419 = vld [vmem:[%s306 + $0x10] sm:$0xff]
        %v420 = vld [vmem:[%s306 + $0x18] sm:$0xff]
        %v421 = vld [vmem:[%s306 + $0x20] sm:$0xff]
        %v422 = vld [vmem:[%s306 + $0x28] sm:$0xff]
        %v423 = vld [vmem:[%s306 + $0x30] sm:$0xff]
        %v424 = vld [vmem:[%s306 + $0x38] sm:$0xff]
        %v425 = vld [vmem:[%s306 + $0x40] sm:$0xff]
        %v426 = vld [vmem:[%s306 + $0x48] sm:$0xff]
        %v427 = vld [vmem:[%s306 + $0x50] sm:$0xff]
        %v428 = vld [vmem:[%s306 + $0x58] sm:$0xff]
        %v429 = vld [vmem:[%s306 + $0x60] sm:$0xff]
        %v430 = vld [vmem:[%s306 + $0x68] sm:$0xff]
        %v431 = vld [vmem:[%s306 + $0x70] sm:$0xff]
        %v432 = vld [vmem:[%s306 + $0x78] sm:$0xff]
        %v433 = vld [vmem:[%s306 + $0x80] sm:$0xff]
        %v434 = vld [vmem:[%s306 + $0x88] sm:$0xff]
        %v435 = vld [vmem:[%s306 + $0x90] sm:$0xff]
        %v436 = vld [vmem:[%s306 + $0x98] sm:$0xff]
        %v437 = vld [vmem:[%s306 + $0xa0] sm:$0xff]
        %v438 = vld [vmem:[%s306 + $0xa8] sm:$0xff]
        %v439 = vld [vmem:[%s306 + $0xb0] sm:$0xff]
        %v440 = vld [vmem:[%s306 + $0xb8] sm:$0xff]
        %v441 = vld [vmem:[%s306 + $0xc0] sm:$0xff]
        %v442 = vld [vmem:[%s306 + $0xc8] sm:$0xff]
        %v443 = vld [vmem:[%s306 + $0xd0] sm:$0xff]
        %v444 = vld [vmem:[%s306 + $0xd8] sm:$0xff]
        %v445 = vld [vmem:[%s306 + $0xe0] sm:$0xff]
        %v446 = vld [vmem:[%s306 + $0xe8] sm:$0xff]
        %v447 = vld [vmem:[%s306 + $0xf0] sm:$0xff]
        %v448 = vld [vmem:[%s306 + $0xf8] sm:$0xff]
        %v449 = vld [vmem:[%s306 + $0x100] sm:$0xff]
        %v450 = vld [vmem:[%s306 + $0x108] sm:$0xff]
        %v451 = vld [vmem:[%s306 + $0x110] sm:$0xff]
        %v452 = vld [vmem:[%s306 + $0x118] sm:$0xff]
        %v453 = vld [vmem:[%s306 + $0x120] sm:$0xff]
        %v454 = vld [vmem:[%s306 + $0x128] sm:$0xff]
        %v455 = vld [vmem:[%s306 + $0x130] sm:$0xff]
        %v456 = vld [vmem:[%s306 + $0x138] sm:$0xff]
        %v457 = vld [vmem:[%s306 + $0x140] sm:$0xff]
        %v458 = vld [vmem:[%s306 + $0x148] sm:$0xff]
        %v459 = vld [vmem:[%s306 + $0x150] sm:$0xff]
        %v460 = vld [vmem:[%s306 + $0x158] sm:$0xff]
        %v461 = vld [vmem:[%s306 + $0x160] sm:$0xff]
        %v462 = vld [vmem:[%s306 + $0x168] sm:$0xff]
        %v463 = vld [vmem:[%s306 + $0x170] sm:$0xff]
        %v464 = vld [vmem:[%s306 + $0x178] sm:$0xff]
        %v465 = vld [vmem:[%s306 + $0x180] sm:$0xff]
        %v466 = vld [vmem:[%s306 + $0x188] sm:$0xff]
        %v467 = vld [vmem:[%s306 + $0x190] sm:$0xff]
        %v468 = vld [vmem:[%s306 + $0x198] sm:$0xff]
        %v469 = vld [vmem:[%s306 + $0x1a0] sm:$0xff]
        %v470 = vld [vmem:[%s306 + $0x1a8] sm:$0xff]
        %v471 = vld [vmem:[%s306 + $0x1b0] sm:$0xff]
        %v472 = vld [vmem:[%s306 + $0x1b8] sm:$0xff]
        %v473 = vld [vmem:[%s306 + $0x1c0] sm:$0xff]
        %v474 = vld [vmem:[%s306 + $0x1c8] sm:$0xff]
        %v475 = vld [vmem:[%s306 + $0x1d0] sm:$0xff]
        %v476 = vld [vmem:[%s306 + $0x1d8] sm:$0xff]
        %v477 = vld [vmem:[%s306 + $0x1e0] sm:$0xff]
        %v478 = vld [vmem:[%s306 + $0x1e8] sm:$0xff]
        %v479 = vld [vmem:[%s306 + $0x1f0] sm:$0xff]
        %v480 = vld [vmem:[%s306 + $0x1f8] sm:$0xff]
        %v481 = vld [vmem:[%s315] sm:$0xf]
        %v483 = vlaneseq
        %v484 = vshrl.u32 %v483, 7
        %v485 = vsub.s32 0, %v484
        %v486 = vrot.slane %v481, %v485
        %v487 = vlaneseq
        %v488 = vshrl.u32 %v487, 7
        %v489 = vsub.s32 1, %v488
        %v490 = vrot.slane %v481, %v489
        %v491 = vlaneseq
        %v492 = vshrl.u32 %v491, 7
        %v493 = vsub.s32 2, %v492
        %v494 = vrot.slane %v481, %v493
        %v495 = vlaneseq
        %v496 = vshrl.u32 %v495, 7
        %v497 = vsub.s32 3, %v496
        %v498 = vrot.slane %v481, %v497
        %v519 = vunpack.c.l.b16 %v401
        %v520 = vunpack.c.h.b16 %v401
        %v521 = vunpack.c.l.b16 %v402
        %v522 = vunpack.c.h.b16 %v402
        %v523 = vunpack.c.l.b16 %v403
        %v524 = vunpack.c.h.b16 %v403
        %v525 = vunpack.c.l.b16 %v404
        %v526 = vunpack.c.h.b16 %v404
        %v527 = vunpack.c.l.b16 %v405
        %v528 = vunpack.c.h.b16 %v405
        %v529 = vunpack.c.l.b16 %v406
        %v530 = vunpack.c.h.b16 %v406
        %v531 = vunpack.c.l.b16 %v407
        %v532 = vunpack.c.h.b16 %v407
        %v533 = vunpack.c.l.b16 %v408
        %v534 = vunpack.c.h.b16 %v408
        %v535 = vunpack.c.l.b16 %v409
        %v536 = vunpack.c.h.b16 %v409
        %v537 = vunpack.c.l.b16 %v410
        %v538 = vunpack.c.h.b16 %v410
        %v539 = vunpack.c.l.b16 %v411
        %v540 = vunpack.c.h.b16 %v411
        %v541 = vunpack.c.l.b16 %v412
        %v542 = vunpack.c.h.b16 %v412
        %v543 = vunpack.c.l.b16 %v413
        %v544 = vunpack.c.h.b16 %v413
        %v545 = vunpack.c.l.b16 %v414
        %v546 = vunpack.c.h.b16 %v414
        %v547 = vunpack.c.l.b16 %v415
        %v548 = vunpack.c.h.b16 %v415
        %v549 = vunpack.c.l.b16 %v416
        %v550 = vunpack.c.h.b16 %v416
        %v551 = vpack.c.b16 %v521, %v519
        %v552 = vpack.c.b16 %v522, %v520
        %v553 = vpack.c.b16 %v525, %v523
        %v554 = vpack.c.b16 %v526, %v524
        %v555 = vpack.c.b16 %v529, %v527
        %v556 = vpack.c.b16 %v530, %v528
        %v557 = vpack.c.b16 %v533, %v531
        %v558 = vpack.c.b16 %v534, %v532
        %v559 = vpack.c.b16 %v537, %v535
        %v560 = vpack.c.b16 %v538, %v536
        %v561 = vpack.c.b16 %v541, %v539
        %v562 = vpack.c.b16 %v542, %v540
        %v563 = vpack.c.b16 %v545, %v543
        %v564 = vpack.c.b16 %v546, %v544
        %v565 = vpack.c.b16 %v549, %v547
        %v566 = vpack.c.b16 %v550, %v548
        %v647 = vunpack.c.l.b16 %v417
        %v648 = vunpack.c.h.b16 %v417
        %v649 = vunpack.c.l.b16 %v418
        %v650 = vunpack.c.h.b16 %v418
        %v651 = vunpack.c.l.b16 %v419
        %v652 = vunpack.c.h.b16 %v419
        %v653 = vunpack.c.l.b16 %v420
        %v654 = vunpack.c.h.b16 %v420
        %v655 = vunpack.c.l.b16 %v421
        %v656 = vunpack.c.h.b16 %v421
        %v657 = vunpack.c.l.b16 %v422
        %v658 = vunpack.c.h.b16 %v422
        %v659 = vunpack.c.l.b16 %v423
        %v660 = vunpack.c.h.b16 %v423
        %v661 = vunpack.c.l.b16 %v424
        %v662 = vunpack.c.h.b16 %v424
        %v663 = vunpack.c.l.b16 %v425
        %v664 = vunpack.c.h.b16 %v425
        %v665 = vunpack.c.l.b16 %v426
        %v666 = vunpack.c.h.b16 %v426
        %v667 = vunpack.c.l.b16 %v427
        %v668 = vunpack.c.h.b16 %v427
        %v669 = vunpack.c.l.b16 %v428
        %v670 = vunpack.c.h.b16 %v428
        %v671 = vunpack.c.l.b16 %v429
        %v672 = vunpack.c.h.b16 %v429
        %v673 = vunpack.c.l.b16 %v430
        %v674 = vunpack.c.h.b16 %v430
        %v675 = vunpack.c.l.b16 %v431
        %v676 = vunpack.c.h.b16 %v431
        %v677 = vunpack.c.l.b16 %v432
        %v678 = vunpack.c.h.b16 %v432
        %v679 = vunpack.c.l.b16 %v433
        %v680 = vunpack.c.h.b16 %v433
        %v681 = vunpack.c.l.b16 %v434
        %v682 = vunpack.c.h.b16 %v434
        %v683 = vunpack.c.l.b16 %v435
        %v684 = vunpack.c.h.b16 %v435
        %v685 = vunpack.c.l.b16 %v436
        %v686 = vunpack.c.h.b16 %v436
        %v687 = vunpack.c.l.b16 %v437
        %v688 = vunpack.c.h.b16 %v437
        %v689 = vunpack.c.l.b16 %v438
        %v690 = vunpack.c.h.b16 %v438
        %v691 = vunpack.c.l.b16 %v439
        %v692 = vunpack.c.h.b16 %v439
        %v693 = vunpack.c.l.b16 %v440
        %v694 = vunpack.c.h.b16 %v440
        %v695 = vunpack.c.l.b16 %v441
        %v696 = vunpack.c.h.b16 %v441
        %v697 = vunpack.c.l.b16 %v442
        %v698 = vunpack.c.h.b16 %v442
        %v699 = vunpack.c.l.b16 %v443
        %v700 = vunpack.c.h.b16 %v443
        %v701 = vunpack.c.l.b16 %v444
        %v702 = vunpack.c.h.b16 %v444
        %v703 = vunpack.c.l.b16 %v445
        %v704 = vunpack.c.h.b16 %v445
        %v705 = vunpack.c.l.b16 %v446
        %v706 = vunpack.c.h.b16 %v446
        %v707 = vunpack.c.l.b16 %v447
        %v708 = vunpack.c.h.b16 %v447
        %v709 = vunpack.c.l.b16 %v448
        %v710 = vunpack.c.h.b16 %v448
        %v711 = vunpack.c.l.b16 %v449
        %v712 = vunpack.c.h.b16 %v449
        %v713 = vunpack.c.l.b16 %v450
        %v714 = vunpack.c.h.b16 %v450
        %v715 = vunpack.c.l.b16 %v451
        %v716 = vunpack.c.h.b16 %v451
        %v717 = vunpack.c.l.b16 %v452
        %v718 = vunpack.c.h.b16 %v452
        %v719 = vunpack.c.l.b16 %v453
        %v720 = vunpack.c.h.b16 %v453
        %v721 = vunpack.c.l.b16 %v454
        %v722 = vunpack.c.h.b16 %v454
        %v723 = vunpack.c.l.b16 %v455
        %v724 = vunpack.c.h.b16 %v455
        %v725 = vunpack.c.l.b16 %v456
        %v726 = vunpack.c.h.b16 %v456
        %v727 = vunpack.c.l.b16 %v457
        %v728 = vunpack.c.h.b16 %v457
        %v729 = vunpack.c.l.b16 %v458
        %v730 = vunpack.c.h.b16 %v458
        %v731 = vunpack.c.l.b16 %v459
        %v732 = vunpack.c.h.b16 %v459
        %v733 = vunpack.c.l.b16 %v460
        %v734 = vunpack.c.h.b16 %v460
        %v735 = vunpack.c.l.b16 %v461
        %v736 = vunpack.c.h.b16 %v461
        %v737 = vunpack.c.l.b16 %v462
        %v738 = vunpack.c.h.b16 %v462
        %v739 = vunpack.c.l.b16 %v463
        %v740 = vunpack.c.h.b16 %v463
        %v741 = vunpack.c.l.b16 %v464
        %v742 = vunpack.c.h.b16 %v464
        %v743 = vunpack.c.l.b16 %v465
        %v744 = vunpack.c.h.b16 %v465
        %v745 = vunpack.c.l.b16 %v466
        %v746 = vunpack.c.h.b16 %v466
        %v747 = vunpack.c.l.b16 %v467
        %v748 = vunpack.c.h.b16 %v467
        %v749 = vunpack.c.l.b16 %v468
        %v750 = vunpack.c.h.b16 %v468
        %v751 = vunpack.c.l.b16 %v469
        %v752 = vunpack.c.h.b16 %v469
        %v753 = vunpack.c.l.b16 %v470
        %v754 = vunpack.c.h.b16 %v470
        %v755 = vunpack.c.l.b16 %v471
        %v756 = vunpack.c.h.b16 %v471
        %v757 = vunpack.c.l.b16 %v472
        %v758 = vunpack.c.h.b16 %v472
        %v759 = vunpack.c.l.b16 %v473
        %v760 = vunpack.c.h.b16 %v473
        %v761 = vunpack.c.l.b16 %v474
        %v762 = vunpack.c.h.b16 %v474
        %v763 = vunpack.c.l.b16 %v475
        %v764 = vunpack.c.h.b16 %v475
        %v765 = vunpack.c.l.b16 %v476
        %v766 = vunpack.c.h.b16 %v476
        %v767 = vunpack.c.l.b16 %v477
        %v768 = vunpack.c.h.b16 %v477
        %v769 = vunpack.c.l.b16 %v478
        %v770 = vunpack.c.h.b16 %v478
        %v771 = vunpack.c.l.b16 %v479
        %v772 = vunpack.c.h.b16 %v479
        %v773 = vunpack.c.l.b16 %v480
        %v774 = vunpack.c.h.b16 %v480
        %v775 = vpack.c.b16 %v651, %v647
        %v776 = vpack.c.b16 %v652, %v648
        %v777 = vpack.c.b16 %v653, %v649
        %v778 = vpack.c.b16 %v654, %v650
        %v779 = vpack.c.b16 %v659, %v655
        %v780 = vpack.c.b16 %v660, %v656
        %v781 = vpack.c.b16 %v661, %v657
        %v782 = vpack.c.b16 %v662, %v658
        %v783 = vpack.c.b16 %v667, %v663
        %v784 = vpack.c.b16 %v668, %v664
        %v785 = vpack.c.b16 %v669, %v665
        %v786 = vpack.c.b16 %v670, %v666
        %v787 = vpack.c.b16 %v675, %v671
        %v788 = vpack.c.b16 %v676, %v672
        %v789 = vpack.c.b16 %v677, %v673
        %v790 = vpack.c.b16 %v678, %v674
        %v791 = vpack.c.b16 %v683, %v679
        %v792 = vpack.c.b16 %v684, %v680
        %v793 = vpack.c.b16 %v685, %v681
        %v794 = vpack.c.b16 %v686, %v682
        %v795 = vpack.c.b16 %v691, %v687
        %v796 = vpack.c.b16 %v692, %v688
        %v797 = vpack.c.b16 %v693, %v689
        %v798 = vpack.c.b16 %v694, %v690
        %v799 = vpack.c.b16 %v699, %v695
        %v800 = vpack.c.b16 %v700, %v696
        %v801 = vpack.c.b16 %v701, %v697
        %v802 = vpack.c.b16 %v702, %v698
        %v803 = vpack.c.b16 %v707, %v703
        %v804 = vpack.c.b16 %v708, %v704
        %v805 = vpack.c.b16 %v709, %v705
        %v806 = vpack.c.b16 %v710, %v706
        %v807 = vpack.c.b16 %v715, %v711
        %v808 = vpack.c.b16 %v716, %v712
        %v809 = vpack.c.b16 %v717, %v713
        %v810 = vpack.c.b16 %v718, %v714
        %v811 = vpack.c.b16 %v723, %v719
        %v812 = vpack.c.b16 %v724, %v720
        %v813 = vpack.c.b16 %v725, %v721
        %v814 = vpack.c.b16 %v726, %v722
        %v815 = vpack.c.b16 %v731, %v727
        %v816 = vpack.c.b16 %v732, %v728
        %v817 = vpack.c.b16 %v733, %v729
        %v818 = vpack.c.b16 %v734, %v730
        %v819 = vpack.c.b16 %v739, %v735
        %v820 = vpack.c.b16 %v740, %v736
        %v821 = vpack.c.b16 %v741, %v737
        %v822 = vpack.c.b16 %v742, %v738
        %v823 = vpack.c.b16 %v747, %v743
        %v824 = vpack.c.b16 %v748, %v744
        %v825 = vpack.c.b16 %v749, %v745
        %v826 = vpack.c.b16 %v750, %v746
        %v827 = vpack.c.b16 %v755, %v751
        %v828 = vpack.c.b16 %v756, %v752
        %v829 = vpack.c.b16 %v757, %v753
        %v830 = vpack.c.b16 %v758, %v754
        %v831 = vpack.c.b16 %v763, %v759
        %v832 = vpack.c.b16 %v764, %v760
        %v833 = vpack.c.b16 %v765, %v761
        %v834 = vpack.c.b16 %v766, %v762
        %v835 = vpack.c.b16 %v771, %v767
        %v836 = vpack.c.b16 %v772, %v768
        %v837 = vpack.c.b16 %v773, %v769
        %v838 = vpack.c.b16 %v774, %v770
        %903 = vmatprep.subr.bf16.mxu0 %v776
        %904 = vmatpush1.bf16.msra.mxu0 %v775
        %905 = vmatprep.subr.bf16.mxu0 %v780
        %906 = vmatpush1.bf16.msra.mxu0 %v779
        %907 = vmatprep.subr.bf16.mxu0 %v784
        %908 = vmatpush1.bf16.msra.mxu0 %v783
        %909 = vmatprep.subr.bf16.mxu0 %v788
        %910 = vmatpush1.bf16.msra.mxu0 %v787
        %911 = vmatprep.subr.bf16.mxu0 %v792
        %912 = vmatpush1.bf16.msra.mxu0 %v791
        %913 = vmatprep.subr.bf16.mxu0 %v796
        %914 = vmatpush1.bf16.msra.mxu0 %v795
        %915 = vmatprep.subr.bf16.mxu0 %v800
        %916 = vmatpush1.bf16.msra.mxu0 %v799
        %917 = vmatprep.subr.bf16.mxu0 %v804
        %918 = vmatpush1.bf16.msra.mxu0 %v803
        %919 = vmatprep.subr.bf16.mxu0 %v808
        %920 = vmatpush1.bf16.msra.mxu0 %v807
        %921 = vmatprep.subr.bf16.mxu0 %v812
        %922 = vmatpush1.bf16.msra.mxu0 %v811
        %923 = vmatprep.subr.bf16.mxu0 %v816
        %924 = vmatpush1.bf16.msra.mxu0 %v815
        %925 = vmatprep.subr.bf16.mxu0 %v820
        %926 = vmatpush1.bf16.msra.mxu0 %v819
        %927 = vmatprep.subr.bf16.mxu0 %v824
        %928 = vmatpush1.bf16.msra.mxu0 %v823
        %929 = vmatprep.subr.bf16.mxu0 %v828
        %930 = vmatpush1.bf16.msra.mxu0 %v827
        %931 = vmatprep.subr.bf16.mxu0 %v832
        %932 = vmatpush1.bf16.msra.mxu0 %v831
        %933 = vmatprep.subr.bf16.mxu0 %v836
        %934 = vmatpush1.bf16.msra.mxu0 %v835
        %935 = vmatprep.mubr.bf16.mxu0 %v552
        %936 = vmatmul.mubr.bf16.gmra.mrb[0].mxu0 %v551
        %v937 = vpop.f32.mrb[0].mxu0
        %v938 = vadd.f32 %v486, %v937
        %v939 = vpop.f32.mrb[0].mxu0
        %v940 = vadd.f32 %v490, %v939
        %v941 = vpop.f32.mrb[0].mxu0
        %v942 = vadd.f32 %v486, %v941
        %v943 = vpop.f32.mrb[0].mxu0
        %v944 = vadd.f32 %v490, %v943
        %945 = vmatprep.mubr.bf16.mxu0 %v554
        %946 = vmatmul.mubr.bf16.gmra.mrb[0].mxu0 %v553
        %v947 = vpop.f32.mrb[0].mxu0
        %v948 = vadd.f32 %v486, %v947
        %v949 = vpop.f32.mrb[0].mxu0
        %v950 = vadd.f32 %v490, %v949
        %v951 = vpop.f32.mrb[0].mxu0
        %v952 = vadd.f32 %v486, %v951
        %v953 = vpop.f32.mrb[0].mxu0
        %v954 = vadd.f32 %v490, %v953
        %955 = vmatprep.mubr.bf16.mxu0 %v556
        %956 = vmatmul.mubr.bf16.gmra.mrb[0].mxu0 %v555
        %v957 = vpop.f32.mrb[0].mxu0
        %v958 = vadd.f32 %v486, %v957
        %v959 = vpop.f32.mrb[0].mxu0
        %v960 = vadd.f32 %v490, %v959
        %v961 = vpop.f32.mrb[0].mxu0
        %v962 = vadd.f32 %v486, %v961
        %v963 = vpop.f32.mrb[0].mxu0
        %v964 = vadd.f32 %v490, %v963
        %965 = vmatprep.mubr.bf16.mxu0 %v558
        %966 = vmatmul.mubr.bf16.gmra.mrb[0].mxu0 %v557
        %v967 = vpop.f32.mrb[0].mxu0
        %v968 = vadd.f32 %v486, %v967
        %v969 = vpop.f32.mrb[0].mxu0
        %v970 = vadd.f32 %v490, %v969
        %v971 = vpop.f32.mrb[0].mxu0
        %v972 = vadd.f32 %v486, %v971
        %v973 = vpop.f32.mrb[0].mxu0
        %v974 = vadd.f32 %v490, %v973
        %975 = vmatprep.mubr.bf16.mxu0 %v560
        %976 = vmatmul.mubr.bf16.gmra.mrb[0].mxu0 %v559
        %v977 = vpop.f32.mrb[0].mxu0
        %v978 = vadd.f32 %v486, %v977
        %v979 = vpop.f32.mrb[0].mxu0
        %v980 = vadd.f32 %v490, %v979
        %v981 = vpop.f32.mrb[0].mxu0
        %v982 = vadd.f32 %v486, %v981
        %v983 = vpop.f32.mrb[0].mxu0
        %v984 = vadd.f32 %v490, %v983
        %985 = vmatprep.mubr.bf16.mxu0 %v562
        %986 = vmatmul.mubr.bf16.gmra.mrb[0].mxu0 %v561
        %v987 = vpop.f32.mrb[0].mxu0
        %v988 = vadd.f32 %v486, %v987
        %v989 = vpop.f32.mrb[0].mxu0
        %v990 = vadd.f32 %v490, %v989
        %v991 = vpop.f32.mrb[0].mxu0
        %v992 = vadd.f32 %v486, %v991
        %v993 = vpop.f32.mrb[0].mxu0
        %v994 = vadd.f32 %v490, %v993
        %995 = vmatprep.mubr.bf16.mxu0 %v564
        %996 = vmatmul.mubr.bf16.gmra.mrb[0].mxu0 %v563
        %v997 = vpop.f32.mrb[0].mxu0
        %v998 = vadd.f32 %v486, %v997
        %v999 = vpop.f32.mrb[0].mxu0
        %v1000 = vadd.f32 %v490, %v999
        %v1001 = vpop.f32.mrb[0].mxu0
        %v1002 = vadd.f32 %v486, %v1001
        %v1003 = vpop.f32.mrb[0].mxu0
        %v1004 = vadd.f32 %v490, %v1003
        %1005 = vmatprep.mubr.bf16.mxu0 %v566
        %1006 = vmatmul.mubr.bf16.gmra.mrb[0].mxu0 %v565
        %v1007 = vpop.f32.mrb[0].mxu0
        %v1008 = vadd.f32 %v486, %v1007
        %v1009 = vpop.f32.mrb[0].mxu0
        %v1010 = vadd.f32 %v490, %v1009
        %v1011 = vpop.f32.mrb[0].mxu0
        %v1012 = vadd.f32 %v486, %v1011
        %v1013 = vpop.f32.mrb[0].mxu0
        %v1014 = vadd.f32 %v490, %v1013
        %1015 = vdwg.mxu0
        %1016 = vmatprep.subr.bf16.mxu0 %v778
        %1017 = vmatpush1.bf16.msra.mxu0 %v777
        %1018 = vmatprep.subr.bf16.mxu0 %v782
        %1019 = vmatpush1.bf16.msra.mxu0 %v781
        %1020 = vmatprep.subr.bf16.mxu0 %v786
        %1021 = vmatpush1.bf16.msra.mxu0 %v785
        %1022 = vmatprep.subr.bf16.mxu0 %v790
        %1023 = vmatpush1.bf16.msra.mxu0 %v789
        %1024 = vmatprep.subr.bf16.mxu0 %v794
        %1025 = vmatpush1.bf16.msra.mxu0 %v793
        %1026 = vmatprep.subr.bf16.mxu0 %v798
        %1027 = vmatpush1.bf16.msra.mxu0 %v797
        %1028 = vmatprep.subr.bf16.mxu0 %v802
        %1029 = vmatpush1.bf16.msra.mxu0 %v801
        %1030 = vmatprep.subr.bf16.mxu0 %v806
        %1031 = vmatpush1.bf16.msra.mxu0 %v805
        %1032 = vmatprep.subr.bf16.mxu0 %v810
        %1033 = vmatpush1.bf16.msra.mxu0 %v809
        %1034 = vmatprep.subr.bf16.mxu0 %v814
        %1035 = vmatpush1.bf16.msra.mxu0 %v813
        %1036 = vmatprep.subr.bf16.mxu0 %v818
        %1037 = vmatpush1.bf16.msra.mxu0 %v817
        %1038 = vmatprep.subr.bf16.mxu0 %v822
        %1039 = vmatpush1.bf16.msra.mxu0 %v821
        %1040 = vmatprep.subr.bf16.mxu0 %v826
        %1041 = vmatpush1.bf16.msra.mxu0 %v825
        %1042 = vmatprep.subr.bf16.mxu0 %v830
        %1043 = vmatpush1.bf16.msra.mxu0 %v829
        %1044 = vmatprep.subr.bf16.mxu0 %v834
        %1045 = vmatpush1.bf16.msra.mxu0 %v833
        %1046 = vmatprep.subr.bf16.mxu0 %v838
        %1047 = vmatpush1.bf16.msra.mxu0 %v837
        %1048 = vmatprep.mubr.bf16.mxu0 %v552
        %1049 = vmatmul.mubr.bf16.gmra.mrb[0].mxu0 %v551
        %v1050 = vpop.f32.mrb[0].mxu0
        %v1051 = vadd.f32 %v494, %v1050
        %v1052 = vpop.f32.mrb[0].mxu0
        %v1053 = vadd.f32 %v498, %v1052
        %v1054 = vpop.f32.mrb[0].mxu0
        %v1055 = vadd.f32 %v494, %v1054
        %v1056 = vpop.f32.mrb[0].mxu0
        %v1057 = vadd.f32 %v498, %v1056
        %1058 = vmatprep.mubr.bf16.mxu0 %v554
        %1059 = vmatmul.mubr.bf16.gmra.mrb[0].mxu0 %v553
        %v1060 = vpop.f32.mrb[0].mxu0
        %v1061 = vadd.f32 %v494, %v1060
        %v1062 = vpop.f32.mrb[0].mxu0
        %v1063 = vadd.f32 %v498, %v1062
        %v1064 = vpop.f32.mrb[0].mxu0
        %v1065 = vadd.f32 %v494, %v1064
        %v1066 = vpop.f32.mrb[0].mxu0
        %v1067 = vadd.f32 %v498, %v1066
        %1068 = vmatprep.mubr.bf16.mxu0 %v556
        %1069 = vmatmul.mubr.bf16.gmra.mrb[0].mxu0 %v555
        %v1070 = vpop.f32.mrb[0].mxu0
        %v1071 = vadd.f32 %v494, %v1070
        %v1072 = vpop.f32.mrb[0].mxu0
        %v1073 = vadd.f32 %v498, %v1072
        %v1074 = vpop.f32.mrb[0].mxu0
        %v1075 = vadd.f32 %v494, %v1074
        %v1076 = vpop.f32.mrb[0].mxu0
        %v1077 = vadd.f32 %v498, %v1076
        %1078 = vmatprep.mubr.bf16.mxu0 %v558
        %1079 = vmatmul.mubr.bf16.gmra.mrb[0].mxu0 %v557
        %v1080 = vpop.f32.mrb[0].mxu0
        %v1081 = vadd.f32 %v494, %v1080
        %v1082 = vpop.f32.mrb[0].mxu0
        %v1083 = vadd.f32 %v498, %v1082
        %v1084 = vpop.f32.mrb[0].mxu0
        %v1085 = vadd.f32 %v494, %v1084
        %v1086 = vpop.f32.mrb[0].mxu0
        %v1087 = vadd.f32 %v498, %v1086
        %1088 = vmatprep.mubr.bf16.mxu0 %v560
        %1089 = vmatmul.mubr.bf16.gmra.mrb[0].mxu0 %v559
        %v1090 = vpop.f32.mrb[0].mxu0
        %v1091 = vadd.f32 %v494, %v1090
        %v1092 = vpop.f32.mrb[0].mxu0
        %v1093 = vadd.f32 %v498, %v1092
        %v1094 = vpop.f32.mrb[0].mxu0
        %v1095 = vadd.f32 %v494, %v1094
        %v1096 = vpop.f32.mrb[0].mxu0
        %v1097 = vadd.f32 %v498, %v1096
        %1098 = vmatprep.mubr.bf16.mxu0 %v562
        %1099 = vmatmul.mubr.bf16.gmra.mrb[0].mxu0 %v561
        %v1100 = vpop.f32.mrb[0].mxu0
        %v1101 = vadd.f32 %v494, %v1100
        %v1102 = vpop.f32.mrb[0].mxu0
        %v1103 = vadd.f32 %v498, %v1102
        %v1104 = vpop.f32.mrb[0].mxu0
        %v1105 = vadd.f32 %v494, %v1104
        %v1106 = vpop.f32.mrb[0].mxu0
        %v1107 = vadd.f32 %v498, %v1106
        %1108 = vmatprep.mubr.bf16.mxu0 %v564
        %1109 = vmatmul.mubr.bf16.gmra.mrb[0].mxu0 %v563
        %v1110 = vpop.f32.mrb[0].mxu0
        %v1111 = vadd.f32 %v494, %v1110
        %v1112 = vpop.f32.mrb[0].mxu0
        %v1113 = vadd.f32 %v498, %v1112
        %v1114 = vpop.f32.mrb[0].mxu0
        %v1115 = vadd.f32 %v494, %v1114
        %v1116 = vpop.f32.mrb[0].mxu0
        %v1117 = vadd.f32 %v498, %v1116
        %1118 = vmatprep.mubr.bf16.mxu0 %v566
        %1119 = vmatmul.mubr.bf16.gmra.mrb[0].mxu0 %v565
        %v1120 = vpop.f32.mrb[0].mxu0
        %v1121 = vadd.f32 %v494, %v1120
        %v1122 = vpop.f32.mrb[0].mxu0
        %v1123 = vadd.f32 %v498, %v1122
        %v1124 = vpop.f32.mrb[0].mxu0
        %v1125 = vadd.f32 %v494, %v1124
        %v1126 = vpop.f32.mrb[0].mxu0
        %v1127 = vadd.f32 %v498, %v1126
        %1128 = vdwg.mxu0
        %v1129 = vxor.u32 %v938, 2147483648
        %v1130 = vxor.u32 %v940, 2147483648
        %v1131 = vxor.u32 %v942, 2147483648
        %v1132 = vxor.u32 %v944, 2147483648
        %v1133 = vxor.u32 %v948, 2147483648
        %v1134 = vxor.u32 %v950, 2147483648
        %v1135 = vxor.u32 %v952, 2147483648
        %v1136 = vxor.u32 %v954, 2147483648
        %v1137 = vxor.u32 %v958, 2147483648
        %v1138 = vxor.u32 %v960, 2147483648
        %v1139 = vxor.u32 %v962, 2147483648
        %v1140 = vxor.u32 %v964, 2147483648
        %v1141 = vxor.u32 %v968, 2147483648
        %v1142 = vxor.u32 %v970, 2147483648
        %v1143 = vxor.u32 %v972, 2147483648
        %v1144 = vxor.u32 %v974, 2147483648
        %v1145 = vxor.u32 %v978, 2147483648
        %v1146 = vxor.u32 %v980, 2147483648
        %v1147 = vxor.u32 %v982, 2147483648
        %v1148 = vxor.u32 %v984, 2147483648
        %v1149 = vxor.u32 %v988, 2147483648
        %v1150 = vxor.u32 %v990, 2147483648
        %v1151 = vxor.u32 %v992, 2147483648
        %v1152 = vxor.u32 %v994, 2147483648
        %v1153 = vxor.u32 %v998, 2147483648
        %v1154 = vxor.u32 %v1000, 2147483648
        %v1155 = vxor.u32 %v1002, 2147483648
        %v1156 = vxor.u32 %v1004, 2147483648
        %v1157 = vxor.u32 %v1008, 2147483648
        %v1158 = vxor.u32 %v1010, 2147483648
        %v1159 = vxor.u32 %v1012, 2147483648
        %v1160 = vxor.u32 %v1014, 2147483648
        %v1161 = vmul.f32 %v1129, 1.442695
        %v1162 = vpow.pop %v1161
        %v1163 = vmul.f32 %v1130, 1.442695
        %v1164 = vpow.pop %v1163
        %v1165 = vmul.f32 %v1131, 1.442695
        %v1166 = vpow.pop %v1165
        %v1167 = vmul.f32 %v1132, 1.442695
        %v1168 = vpow.pop %v1167
        %v1169 = vmul.f32 %v1133, 1.442695
        %v1170 = vpow.pop %v1169
        %v1171 = vmul.f32 %v1134, 1.442695
        %v1172 = vpow.pop %v1171
        %v1173 = vmul.f32 %v1135, 1.442695
        %v1174 = vpow.pop %v1173
        %v1175 = vmul.f32 %v1136, 1.442695
        %v1176 = vpow.pop %v1175
        %v1177 = vmul.f32 %v1137, 1.442695
        %v1178 = vpow.pop %v1177
        %v1179 = vmul.f32 %v1138, 1.442695
        %v1180 = vpow.pop %v1179
        %v1181 = vmul.f32 %v1139, 1.442695
        %v1182 = vpow.pop %v1181
        %v1183 = vmul.f32 %v1140, 1.442695
        %v1184 = vpow.pop %v1183
        %v1185 = vmul.f32 %v1141, 1.442695
        %v1186 = vpow.pop %v1185
        %v1187 = vmul.f32 %v1142, 1.442695
        %v1188 = vpow.pop %v1187
        %v1189 = vmul.f32 %v1143, 1.442695
        %v1190 = vpow.pop %v1189
        %v1191 = vmul.f32 %v1144, 1.442695
        %v1192 = vpow.pop %v1191
        %v1193 = vmul.f32 %v1145, 1.442695
        %v1194 = vpow.pop %v1193
        %v1195 = vmul.f32 %v1146, 1.442695
        %v1196 = vpow.pop %v1195
        %v1197 = vmul.f32 %v1147, 1.442695
        %v1198 = vpow.pop %v1197
        %v1199 = vmul.f32 %v1148, 1.442695
        %v1200 = vpow.pop %v1199
        %v1201 = vmul.f32 %v1149, 1.442695
        %v1202 = vpow.pop %v1201
        %v1203 = vmul.f32 %v1150, 1.442695
        %v1204 = vpow.pop %v1203
        %v1205 = vmul.f32 %v1151, 1.442695
        %v1206 = vpow.pop %v1205
        %v1207 = vmul.f32 %v1152, 1.442695
        %v1208 = vpow.pop %v1207
        %v1209 = vmul.f32 %v1153, 1.442695
        %v1210 = vpow.pop %v1209
        %v1211 = vmul.f32 %v1154, 1.442695
        %v1212 = vpow.pop %v1211
        %v1213 = vmul.f32 %v1155, 1.442695
        %v1214 = vpow.pop %v1213
        %v1215 = vmul.f32 %v1156, 1.442695
        %v1216 = vpow.pop %v1215
        %v1217 = vmul.f32 %v1157, 1.442695
        %v1218 = vpow.pop %v1217
        %v1219 = vmul.f32 %v1158, 1.442695
        %v1220 = vpow.pop %v1219
        %v1221 = vmul.f32 %v1159, 1.442695
        %v1222 = vpow.pop %v1221
        %v1223 = vmul.f32 %v1160, 1.442695
        %v1224 = vpow.pop %v1223
        %v1225 = vadd.f32 %v1162, 1.0
        %v1226 = vadd.f32 %v1164, 1.0
        %v1227 = vadd.f32 %v1166, 1.0
        %v1228 = vadd.f32 %v1168, 1.0
        %v1229 = vadd.f32 %v1170, 1.0
        %v1230 = vadd.f32 %v1172, 1.0
        %v1231 = vadd.f32 %v1174, 1.0
        %v1232 = vadd.f32 %v1176, 1.0
        %v1233 = vadd.f32 %v1178, 1.0
        %v1234 = vadd.f32 %v1180, 1.0
        %v1235 = vadd.f32 %v1182, 1.0
        %v1236 = vadd.f32 %v1184, 1.0
        %v1237 = vadd.f32 %v1186, 1.0
        %v1238 = vadd.f32 %v1188, 1.0
        %v1239 = vadd.f32 %v1190, 1.0
        %v1240 = vadd.f32 %v1192, 1.0
        %v1241 = vadd.f32 %v1194, 1.0
        %v1242 = vadd.f32 %v1196, 1.0
        %v1243 = vadd.f32 %v1198, 1.0
        %v1244 = vadd.f32 %v1200, 1.0
        %v1245 = vadd.f32 %v1202, 1.0
        %v1246 = vadd.f32 %v1204, 1.0
        %v1247 = vadd.f32 %v1206, 1.0
        %v1248 = vadd.f32 %v1208, 1.0
        %v1249 = vadd.f32 %v1210, 1.0
        %v1250 = vadd.f32 %v1212, 1.0
        %v1251 = vadd.f32 %v1214, 1.0
        %v1252 = vadd.f32 %v1216, 1.0
        %v1253 = vadd.f32 %v1218, 1.0
        %v1254 = vadd.f32 %v1220, 1.0
        %v1255 = vadd.f32 %v1222, 1.0
        %v1256 = vadd.f32 %v1224, 1.0
        %v1257 = vrcp.pop %v1225
        %v1258 = vmul.f32 1.0, %v1257
        %v1259 = vrcp.pop %v1226
        %v1260 = vmul.f32 1.0, %v1259
        %v1261 = vrcp.pop %v1227
        %v1262 = vmul.f32 1.0, %v1261
        %v1263 = vrcp.pop %v1228
        %v1264 = vmul.f32 1.0, %v1263
        %v1265 = vrcp.pop %v1229
        %v1266 = vmul.f32 1.0, %v1265
        %v1267 = vrcp.pop %v1230
        %v1268 = vmul.f32 1.0, %v1267
        %v1269 = vrcp.pop %v1231
        %v1270 = vmul.f32 1.0, %v1269
        %v1271 = vrcp.pop %v1232
        %v1272 = vmul.f32 1.0, %v1271
        %v1273 = vrcp.pop %v1233
        %v1274 = vmul.f32 1.0, %v1273
        %v1275 = vrcp.pop %v1234
        %v1276 = vmul.f32 1.0, %v1275
        %v1277 = vrcp.pop %v1235
        %v1278 = vmul.f32 1.0, %v1277
        %v1279 = vrcp.pop %v1236
        %v1280 = vmul.f32 1.0, %v1279
        %v1281 = vrcp.pop %v1237
        %v1282 = vmul.f32 1.0, %v1281
        %v1283 = vrcp.pop %v1238
        %v1284 = vmul.f32 1.0, %v1283
        %v1285 = vrcp.pop %v1239
        %v1286 = vmul.f32 1.0, %v1285
        %v1287 = vrcp.pop %v1240
        %v1288 = vmul.f32 1.0, %v1287
        %v1289 = vrcp.pop %v1241
        %v1290 = vmul.f32 1.0, %v1289
        %v1291 = vrcp.pop %v1242
        %v1292 = vmul.f32 1.0, %v1291
        %v1293 = vrcp.pop %v1243
        %v1294 = vmul.f32 1.0, %v1293
        %v1295 = vrcp.pop %v1244
        %v1296 = vmul.f32 1.0, %v1295
        %v1297 = vrcp.pop %v1245
        %v1298 = vmul.f32 1.0, %v1297
        %v1299 = vrcp.pop %v1246
        %v1300 = vmul.f32 1.0, %v1299
        %v1301 = vrcp.pop %v1247
        %v1302 = vmul.f32 1.0, %v1301
        %v1303 = vrcp.pop %v1248
        %v1304 = vmul.f32 1.0, %v1303
        %v1305 = vrcp.pop %v1249
        %v1306 = vmul.f32 1.0, %v1305
        %v1307 = vrcp.pop %v1250
        %v1308 = vmul.f32 1.0, %v1307
        %v1309 = vrcp.pop %v1251
        %v1310 = vmul.f32 1.0, %v1309
        %v1311 = vrcp.pop %v1252
        %v1312 = vmul.f32 1.0, %v1311
        %v1313 = vrcp.pop %v1253
        %v1314 = vmul.f32 1.0, %v1313
        %v1315 = vrcp.pop %v1254
        %v1316 = vmul.f32 1.0, %v1315
        %v1317 = vrcp.pop %v1255
        %v1318 = vmul.f32 1.0, %v1317
        %v1319 = vrcp.pop %v1256
        %v1320 = vmul.f32 1.0, %v1319
        %v1321 = vmul.f32 %v938, %v1258
        %v1322 = vmul.f32 %v940, %v1260
        %v1323 = vmul.f32 %v942, %v1262
        %v1324 = vmul.f32 %v944, %v1264
        %v1325 = vmul.f32 %v948, %v1266
        %v1326 = vmul.f32 %v950, %v1268
        %v1327 = vmul.f32 %v952, %v1270
        %v1328 = vmul.f32 %v954, %v1272
        %v1329 = vmul.f32 %v958, %v1274
        %v1330 = vmul.f32 %v960, %v1276
        %v1331 = vmul.f32 %v962, %v1278
        %v1332 = vmul.f32 %v964, %v1280
        %v1333 = vmul.f32 %v968, %v1282
        %v1334 = vmul.f32 %v970, %v1284
        %v1335 = vmul.f32 %v972, %v1286
        %v1336 = vmul.f32 %v974, %v1288
        %v1337 = vmul.f32 %v978, %v1290
        %v1338 = vmul.f32 %v980, %v1292
        %v1339 = vmul.f32 %v982, %v1294
        %v1340 = vmul.f32 %v984, %v1296
        %v1341 = vmul.f32 %v988, %v1298
        %v1342 = vmul.f32 %v990, %v1300
        %v1343 = vmul.f32 %v992, %v1302
        %v1344 = vmul.f32 %v994, %v1304
        %v1345 = vmul.f32 %v998, %v1306
        %v1346 = vmul.f32 %v1000, %v1308
        %v1347 = vmul.f32 %v1002, %v1310
        %v1348 = vmul.f32 %v1004, %v1312
        %v1349 = vmul.f32 %v1008, %v1314
        %v1350 = vmul.f32 %v1010, %v1316
        %v1351 = vmul.f32 %v1012, %v1318
        %v1352 = vmul.f32 %v1014, %v1320
        %v1353 = vmul.f32 %v1321, %v1051
        %v1354 = vmul.f32 %v1322, %v1053
        %v1355 = vmul.f32 %v1323, %v1055
        %v1356 = vmul.f32 %v1324, %v1057
        %v1357 = vmul.f32 %v1325, %v1061
        %v1358 = vmul.f32 %v1326, %v1063
        %v1359 = vmul.f32 %v1327, %v1065
        %v1360 = vmul.f32 %v1328, %v1067
        %v1361 = vmul.f32 %v1329, %v1071
        %v1362 = vmul.f32 %v1330, %v1073
        %v1363 = vmul.f32 %v1331, %v1075
        %v1364 = vmul.f32 %v1332, %v1077
        %v1365 = vmul.f32 %v1333, %v1081
        %v1366 = vmul.f32 %v1334, %v1083
        %v1367 = vmul.f32 %v1335, %v1085
        %v1368 = vmul.f32 %v1336, %v1087
        %v1369 = vmul.f32 %v1337, %v1091
        %v1370 = vmul.f32 %v1338, %v1093
        %v1371 = vmul.f32 %v1339, %v1095
        %v1372 = vmul.f32 %v1340, %v1097
        %v1373 = vmul.f32 %v1341, %v1101
        %v1374 = vmul.f32 %v1342, %v1103
        %v1375 = vmul.f32 %v1343, %v1105
        %v1376 = vmul.f32 %v1344, %v1107
        %v1377 = vmul.f32 %v1345, %v1111
        %v1378 = vmul.f32 %v1346, %v1113
        %v1379 = vmul.f32 %v1347, %v1115
        %v1380 = vmul.f32 %v1348, %v1117
        %v1381 = vmul.f32 %v1349, %v1121
        %v1382 = vmul.f32 %v1350, %v1123
        %v1383 = vmul.f32 %v1351, %v1125
        %v1384 = vmul.f32 %v1352, %v1127
        %v1385 = vld [vmem:[#allocation2] sm:$0xff]
        %v1386 = vld [vmem:[#allocation2 + $0x8] sm:$0xff]
        %v1387 = vld [vmem:[#allocation2 + $0x10] sm:$0xff]
        %v1388 = vld [vmem:[#allocation2 + $0x18] sm:$0xff]
        %v1389 = vld [vmem:[#allocation2 + $0x20] sm:$0xff]
        %v1390 = vld [vmem:[#allocation2 + $0x28] sm:$0xff]
        %v1391 = vld [vmem:[#allocation2 + $0x30] sm:$0xff]
        %v1392 = vld [vmem:[#allocation2 + $0x38] sm:$0xff]
        %v1393 = vld [vmem:[#allocation2 + $0x40] sm:$0xff]
        %v1394 = vld [vmem:[#allocation2 + $0x48] sm:$0xff]
        %v1395 = vld [vmem:[#allocation2 + $0x50] sm:$0xff]
        %v1396 = vld [vmem:[#allocation2 + $0x58] sm:$0xff]
        %v1397 = vld [vmem:[#allocation2 + $0x60] sm:$0xff]
        %v1398 = vld [vmem:[#allocation2 + $0x68] sm:$0xff]
        %v1399 = vld [vmem:[#allocation2 + $0x70] sm:$0xff]
        %v1400 = vld [vmem:[#allocation2 + $0x78] sm:$0xff]
        %v1401 = vld [vmem:[#allocation2 + $0x80] sm:$0xff]
        %v1402 = vld [vmem:[#allocation2 + $0x88] sm:$0xff]
        %v1403 = vld [vmem:[#allocation2 + $0x90] sm:$0xff]
        %v1404 = vld [vmem:[#allocation2 + $0x98] sm:$0xff]
        %v1405 = vld [vmem:[#allocation2 + $0xa0] sm:$0xff]
        %v1406 = vld [vmem:[#allocation2 + $0xa8] sm:$0xff]
        %v1407 = vld [vmem:[#allocation2 + $0xb0] sm:$0xff]
        %v1408 = vld [vmem:[#allocation2 + $0xb8] sm:$0xff]
        %v1409 = vld [vmem:[#allocation2 + $0xc0] sm:$0xff]
        %v1410 = vld [vmem:[#allocation2 + $0xc8] sm:$0xff]
        %v1411 = vld [vmem:[#allocation2 + $0xd0] sm:$0xff]
        %v1412 = vld [vmem:[#allocation2 + $0xd8] sm:$0xff]
        %v1413 = vld [vmem:[#allocation2 + $0xe0] sm:$0xff]
        %v1414 = vld [vmem:[#allocation2 + $0xe8] sm:$0xff]
        %v1415 = vld [vmem:[#allocation2 + $0xf0] sm:$0xff]
        %v1416 = vld [vmem:[#allocation2 + $0xf8] sm:$0xff]
        %v1417 = vpack.c.bf16 %v1355, %v1353
        %v1418 = vpack.c.bf16 %v1356, %v1354
        %v1419 = vpack.c.bf16 %v1359, %v1357
        %v1420 = vpack.c.bf16 %v1360, %v1358
        %v1421 = vpack.c.bf16 %v1363, %v1361
        %v1422 = vpack.c.bf16 %v1364, %v1362
        %v1423 = vpack.c.bf16 %v1367, %v1365
        %v1424 = vpack.c.bf16 %v1368, %v1366
        %v1425 = vpack.c.bf16 %v1371, %v1369
        %v1426 = vpack.c.bf16 %v1372, %v1370
        %v1427 = vpack.c.bf16 %v1375, %v1373
        %v1428 = vpack.c.bf16 %v1376, %v1374
        %v1429 = vpack.c.bf16 %v1379, %v1377
        %v1430 = vpack.c.bf16 %v1380, %v1378
        %v1431 = vpack.c.bf16 %v1383, %v1381
        %v1432 = vpack.c.bf16 %v1384, %v1382
        %v1433 = vld [vmem:[%s324] sm:$0xff]
        %v1434 = vld [vmem:[%s324 + $0x8] sm:$0xff]
        %v1435 = vld [vmem:[%s324 + $0x10] sm:$0xff]
        %v1436 = vld [vmem:[%s324 + $0x18] sm:$0xff]
        %v1437 = vld [vmem:[%s324 + $0x20] sm:$0xff]
        %v1438 = vld [vmem:[%s324 + $0x28] sm:$0xff]
        %v1439 = vld [vmem:[%s324 + $0x30] sm:$0xff]
        %v1440 = vld [vmem:[%s324 + $0x38] sm:$0xff]
        %v1441 = vld [vmem:[%s324 + $0x40] sm:$0xff]
        %v1442 = vld [vmem:[%s324 + $0x48] sm:$0xff]
        %v1443 = vld [vmem:[%s324 + $0x50] sm:$0xff]
        %v1444 = vld [vmem:[%s324 + $0x58] sm:$0xff]
        %v1445 = vld [vmem:[%s324 + $0x60] sm:$0xff]
        %v1446 = vld [vmem:[%s324 + $0x68] sm:$0xff]
        %v1447 = vld [vmem:[%s324 + $0x70] sm:$0xff]
        %v1448 = vld [vmem:[%s324 + $0x78] sm:$0xff]
        %v1449 = vld [vmem:[%s324 + $0x80] sm:$0xff]
        %v1450 = vld [vmem:[%s324 + $0x88] sm:$0xff]
        %v1451 = vld [vmem:[%s324 + $0x90] sm:$0xff]
        %v1452 = vld [vmem:[%s324 + $0x98] sm:$0xff]
        %v1453 = vld [vmem:[%s324 + $0xa0] sm:$0xff]
        %v1454 = vld [vmem:[%s324 + $0xa8] sm:$0xff]
        %v1455 = vld [vmem:[%s324 + $0xb0] sm:$0xff]
        %v1456 = vld [vmem:[%s324 + $0xb8] sm:$0xff]
        %v1457 = vld [vmem:[%s324 + $0xc0] sm:$0xff]
        %v1458 = vld [vmem:[%s324 + $0xc8] sm:$0xff]
        %v1459 = vld [vmem:[%s324 + $0xd0] sm:$0xff]
        %v1460 = vld [vmem:[%s324 + $0xd8] sm:$0xff]
        %v1461 = vld [vmem:[%s324 + $0xe0] sm:$0xff]
        %v1462 = vld [vmem:[%s324 + $0xe8] sm:$0xff]
        %v1463 = vld [vmem:[%s324 + $0xf0] sm:$0xff]
        %v1464 = vld [vmem:[%s324 + $0xf8] sm:$0xff]
        %v1497 = vunpack.c.l.b16 %v1433
        %v1498 = vunpack.c.h.b16 %v1433
        %v1499 = vunpack.c.l.b16 %v1434
        %v1500 = vunpack.c.h.b16 %v1434
        %v1501 = vunpack.c.l.b16 %v1435
        %v1502 = vunpack.c.h.b16 %v1435
        %v1503 = vunpack.c.l.b16 %v1436
        %v1504 = vunpack.c.h.b16 %v1436
        %v1505 = vunpack.c.l.b16 %v1437
        %v1506 = vunpack.c.h.b16 %v1437
        %v1507 = vunpack.c.l.b16 %v1438
        %v1508 = vunpack.c.h.b16 %v1438
        %v1509 = vunpack.c.l.b16 %v1439
        %v1510 = vunpack.c.h.b16 %v1439
        %v1511 = vunpack.c.l.b16 %v1440
        %v1512 = vunpack.c.h.b16 %v1440
        %v1513 = vunpack.c.l.b16 %v1441
        %v1514 = vunpack.c.h.b16 %v1441
        %v1515 = vunpack.c.l.b16 %v1442
        %v1516 = vunpack.c.h.b16 %v1442
        %v1517 = vunpack.c.l.b16 %v1443
        %v1518 = vunpack.c.h.b16 %v1443
        %v1519 = vunpack.c.l.b16 %v1444
        %v1520 = vunpack.c.h.b16 %v1444
        %v1521 = vunpack.c.l.b16 %v1445
        %v1522 = vunpack.c.h.b16 %v1445
        %v1523 = vunpack.c.l.b16 %v1446
        %v1524 = vunpack.c.h.b16 %v1446
        %v1525 = vunpack.c.l.b16 %v1447
        %v1526 = vunpack.c.h.b16 %v1447
        %v1527 = vunpack.c.l.b16 %v1448
        %v1528 = vunpack.c.h.b16 %v1448
        %v1529 = vunpack.c.l.b16 %v1449
        %v1530 = vunpack.c.h.b16 %v1449
        %v1531 = vunpack.c.l.b16 %v1450
        %v1532 = vunpack.c.h.b16 %v1450
        %v1533 = vunpack.c.l.b16 %v1451
        %v1534 = vunpack.c.h.b16 %v1451
        %v1535 = vunpack.c.l.b16 %v1452
        %v1536 = vunpack.c.h.b16 %v1452
        %v1537 = vunpack.c.l.b16 %v1453
        %v1538 = vunpack.c.h.b16 %v1453
        %v1539 = vunpack.c.l.b16 %v1454
        %v1540 = vunpack.c.h.b16 %v1454
        %v1541 = vunpack.c.l.b16 %v1455
        %v1542 = vunpack.c.h.b16 %v1455
        %v1543 = vunpack.c.l.b16 %v1456
        %v1544 = vunpack.c.h.b16 %v1456
        %v1545 = vunpack.c.l.b16 %v1457
        %v1546 = vunpack.c.h.b16 %v1457
        %v1547 = vunpack.c.l.b16 %v1458
        %v1548 = vunpack.c.h.b16 %v1458
        %v1549 = vunpack.c.l.b16 %v1459
        %v1550 = vunpack.c.h.b16 %v1459
        %v1551 = vunpack.c.l.b16 %v1460
        %v1552 = vunpack.c.h.b16 %v1460
        %v1553 = vunpack.c.l.b16 %v1461
        %v1554 = vunpack.c.h.b16 %v1461
        %v1555 = vunpack.c.l.b16 %v1462
        %v1556 = vunpack.c.h.b16 %v1462
        %v1557 = vunpack.c.l.b16 %v1463
        %v1558 = vunpack.c.h.b16 %v1463
        %v1559 = vunpack.c.l.b16 %v1464
        %v1560 = vunpack.c.h.b16 %v1464
        %v1561 = vpack.c.b16 %v1499, %v1497
        %v1562 = vpack.c.b16 %v1500, %v1498
        %v1563 = vpack.c.b16 %v1503, %v1501
        %v1564 = vpack.c.b16 %v1504, %v1502
        %v1565 = vpack.c.b16 %v1507, %v1505
        %v1566 = vpack.c.b16 %v1508, %v1506
        %v1567 = vpack.c.b16 %v1511, %v1509
        %v1568 = vpack.c.b16 %v1512, %v1510
        %v1569 = vpack.c.b16 %v1515, %v1513
        %v1570 = vpack.c.b16 %v1516, %v1514
        %v1571 = vpack.c.b16 %v1519, %v1517
        %v1572 = vpack.c.b16 %v1520, %v1518
        %v1573 = vpack.c.b16 %v1523, %v1521
        %v1574 = vpack.c.b16 %v1524, %v1522
        %v1575 = vpack.c.b16 %v1527, %v1525
        %v1576 = vpack.c.b16 %v1528, %v1526
        %v1577 = vpack.c.b16 %v1531, %v1529
        %v1578 = vpack.c.b16 %v1532, %v1530
        %v1579 = vpack.c.b16 %v1535, %v1533
        %v1580 = vpack.c.b16 %v1536, %v1534
        %v1581 = vpack.c.b16 %v1539, %v1537
        %v1582 = vpack.c.b16 %v1540, %v1538
        %v1583 = vpack.c.b16 %v1543, %v1541
        %v1584 = vpack.c.b16 %v1544, %v1542
        %v1585 = vpack.c.b16 %v1547, %v1545
        %v1586 = vpack.c.b16 %v1548, %v1546
        %v1587 = vpack.c.b16 %v1551, %v1549
        %v1588 = vpack.c.b16 %v1552, %v1550
        %v1589 = vpack.c.b16 %v1555, %v1553
        %v1590 = vpack.c.b16 %v1556, %v1554
        %v1591 = vpack.c.b16 %v1559, %v1557
        %v1592 = vpack.c.b16 %v1560, %v1558
        %1625 = vmatprep.subr.bf16.mxu0 %v1562
        %1626 = vmatpush1.bf16.msra.mxu0 %v1561
        %1627 = vmatprep.subr.bf16.mxu0 %v1564
        %1628 = vmatpush1.bf16.msra.mxu0 %v1563
        %1629 = vmatprep.subr.bf16.mxu0 %v1566
        %1630 = vmatpush1.bf16.msra.mxu0 %v1565
        %1631 = vmatprep.subr.bf16.mxu0 %v1568
        %1632 = vmatpush1.bf16.msra.mxu0 %v1567
        %1633 = vmatprep.subr.bf16.mxu0 %v1570
        %1634 = vmatpush1.bf16.msra.mxu0 %v1569
        %1635 = vmatprep.subr.bf16.mxu0 %v1572
        %1636 = vmatpush1.bf16.msra.mxu0 %v1571
        %1637 = vmatprep.subr.bf16.mxu0 %v1574
        %1638 = vmatpush1.bf16.msra.mxu0 %v1573
        %1639 = vmatprep.subr.bf16.mxu0 %v1576
        %1640 = vmatpush1.bf16.msra.mxu0 %v1575
        %1641 = vmatprep.subr.bf16.mxu0 %v1578
        %1642 = vmatpush1.bf16.msra.mxu0 %v1577
        %1643 = vmatprep.subr.bf16.mxu0 %v1580
        %1644 = vmatpush1.bf16.msra.mxu0 %v1579
        %1645 = vmatprep.subr.bf16.mxu0 %v1582
        %1646 = vmatpush1.bf16.msra.mxu0 %v1581
        %1647 = vmatprep.subr.bf16.mxu0 %v1584
        %1648 = vmatpush1.bf16.msra.mxu0 %v1583
        %1649 = vmatprep.subr.bf16.mxu0 %v1586
        %1650 = vmatpush1.bf16.msra.mxu0 %v1585
        %1651 = vmatprep.subr.bf16.mxu0 %v1588
        %1652 = vmatpush1.bf16.msra.mxu0 %v1587
        %1653 = vmatprep.subr.bf16.mxu0 %v1590
        %1654 = vmatpush1.bf16.msra.mxu0 %v1589
        %1655 = vmatprep.subr.bf16.mxu0 %v1592
        %1656 = vmatpush1.bf16.msra.mxu0 %v1591
        %1657 = vmatprep.mubr.bf16.mxu0 %v1418
        %1658 = vmatmul.mubr.bf16.gmra.mrb[0].mxu0 %v1417
        %v1659 = vpop.f32.mrb[0].mxu0
        %v1660 = vadd.f32 0.0, %v1659
        %v1661 = vpop.f32.mrb[0].mxu0
        %v1662 = vadd.f32 0.0, %v1661
        %v1663 = vpop.f32.mrb[0].mxu0
        %v1664 = vadd.f32 0.0, %v1663
        %v1665 = vpop.f32.mrb[0].mxu0
        %v1666 = vadd.f32 0.0, %v1665
        %1667 = vmatprep.mubr.bf16.mxu0 %v1420
        %1668 = vmatmul.mubr.bf16.gmra.mrb[0].mxu0 %v1419
        %v1669 = vpop.f32.mrb[0].mxu0
        %v1670 = vadd.f32 0.0, %v1669
        %v1671 = vpop.f32.mrb[0].mxu0
        %v1672 = vadd.f32 0.0, %v1671
        %v1673 = vpop.f32.mrb[0].mxu0
        %v1674 = vadd.f32 0.0, %v1673
        %v1675 = vpop.f32.mrb[0].mxu0
        %v1676 = vadd.f32 0.0, %v1675
        %1677 = vmatprep.mubr.bf16.mxu0 %v1422
        %1678 = vmatmul.mubr.bf16.gmra.mrb[0].mxu0 %v1421
        %v1679 = vpop.f32.mrb[0].mxu0
        %v1680 = vadd.f32 0.0, %v1679
        %v1681 = vpop.f32.mrb[0].mxu0
        %v1682 = vadd.f32 0.0, %v1681
        %v1683 = vpop.f32.mrb[0].mxu0
        %v1684 = vadd.f32 0.0, %v1683
        %v1685 = vpop.f32.mrb[0].mxu0
        %v1686 = vadd.f32 0.0, %v1685
        %1687 = vmatprep.mubr.bf16.mxu0 %v1424
        %1688 = vmatmul.mubr.bf16.gmra.mrb[0].mxu0 %v1423
        %v1689 = vpop.f32.mrb[0].mxu0
        %v1690 = vadd.f32 0.0, %v1689
        %v1691 = vpop.f32.mrb[0].mxu0
        %v1692 = vadd.f32 0.0, %v1691
        %v1693 = vpop.f32.mrb[0].mxu0
        %v1694 = vadd.f32 0.0, %v1693
        %v1695 = vpop.f32.mrb[0].mxu0
        %v1696 = vadd.f32 0.0, %v1695
        %1697 = vmatprep.mubr.bf16.mxu0 %v1426
        %1698 = vmatmul.mubr.bf16.gmra.mrb[0].mxu0 %v1425
        %v1699 = vpop.f32.mrb[0].mxu0
        %v1700 = vadd.f32 0.0, %v1699
        %v1701 = vpop.f32.mrb[0].mxu0
        %v1702 = vadd.f32 0.0, %v1701
        %v1703 = vpop.f32.mrb[0].mxu0
        %v1704 = vadd.f32 0.0, %v1703
        %v1705 = vpop.f32.mrb[0].mxu0
        %v1706 = vadd.f32 0.0, %v1705
        %1707 = vmatprep.mubr.bf16.mxu0 %v1428
        %1708 = vmatmul.mubr.bf16.gmra.mrb[0].mxu0 %v1427
        %v1709 = vpop.f32.mrb[0].mxu0
        %v1710 = vadd.f32 0.0, %v1709
        %v1711 = vpop.f32.mrb[0].mxu0
        %v1712 = vadd.f32 0.0, %v1711
        %v1713 = vpop.f32.mrb[0].mxu0
        %v1714 = vadd.f32 0.0, %v1713
        %v1715 = vpop.f32.mrb[0].mxu0
        %v1716 = vadd.f32 0.0, %v1715
        %1717 = vmatprep.mubr.bf16.mxu0 %v1430
        %1718 = vmatmul.mubr.bf16.gmra.mrb[0].mxu0 %v1429
        %v1719 = vpop.f32.mrb[0].mxu0
        %v1720 = vadd.f32 0.0, %v1719
        %v1721 = vpop.f32.mrb[0].mxu0
        %v1722 = vadd.f32 0.0, %v1721
        %v1723 = vpop.f32.mrb[0].mxu0
        %v1724 = vadd.f32 0.0, %v1723
        %v1725 = vpop.f32.mrb[0].mxu0
        %v1726 = vadd.f32 0.0, %v1725
        %1727 = vmatprep.mubr.bf16.mxu0 %v1432
        %1728 = vmatmul.mubr.bf16.gmra.mrb[0].mxu0 %v1431
        %v1729 = vpop.f32.mrb[0].mxu0
        %v1730 = vadd.f32 0.0, %v1729
        %v1731 = vpop.f32.mrb[0].mxu0
        %v1732 = vadd.f32 0.0, %v1731
        %v1733 = vpop.f32.mrb[0].mxu0
        %v1734 = vadd.f32 0.0, %v1733
        %v1735 = vpop.f32.mrb[0].mxu0
        %v1736 = vadd.f32 0.0, %v1735
        %1737 = vdwg.mxu0
        %v1738 = vadd.f32 %v1385, %v1660
        %v1739 = vadd.f32 %v1386, %v1662
        %v1740 = vadd.f32 %v1387, %v1664
        %v1741 = vadd.f32 %v1388, %v1666
        %v1742 = vadd.f32 %v1389, %v1670
        %v1743 = vadd.f32 %v1390, %v1672
        %v1744 = vadd.f32 %v1391, %v1674
        %v1745 = vadd.f32 %v1392, %v1676
        %v1746 = vadd.f32 %v1393, %v1680
        %v1747 = vadd.f32 %v1394, %v1682
        %v1748 = vadd.f32 %v1395, %v1684
        %v1749 = vadd.f32 %v1396, %v1686
        %v1750 = vadd.f32 %v1397, %v1690
        %v1751 = vadd.f32 %v1398, %v1692
        %v1752 = vadd.f32 %v1399, %v1694
        %v1753 = vadd.f32 %v1400, %v1696
        %v1754 = vadd.f32 %v1401, %v1700
        %v1755 = vadd.f32 %v1402, %v1702
        %v1756 = vadd.f32 %v1403, %v1704
        %v1757 = vadd.f32 %v1404, %v1706
        %v1758 = vadd.f32 %v1405, %v1710
        %v1759 = vadd.f32 %v1406, %v1712
        %v1760 = vadd.f32 %v1407, %v1714
        %v1761 = vadd.f32 %v1408, %v1716
        %v1762 = vadd.f32 %v1409, %v1720
        %v1763 = vadd.f32 %v1410, %v1722
        %v1764 = vadd.f32 %v1411, %v1724
        %v1765 = vadd.f32 %v1412, %v1726
        %v1766 = vadd.f32 %v1413, %v1730
        %v1767 = vadd.f32 %v1414, %v1732
        %v1768 = vadd.f32 %v1415, %v1734
        %v1769 = vadd.f32 %v1416, %v1736
        %1770 = vst [vmem:[#allocation2] sm:$0xff] %v1738
        %1771 = vst [vmem:[#allocation2 + $0x8] sm:$0xff] %v1739
        %1772 = vst [vmem:[#allocation2 + $0x10] sm:$0xff] %v1740
        %1773 = vst [vmem:[#allocation2 + $0x18] sm:$0xff] %v1741
        %1774 = vst [vmem:[#allocation2 + $0x20] sm:$0xff] %v1742
        %1775 = vst [vmem:[#allocation2 + $0x28] sm:$0xff] %v1743
        %1776 = vst [vmem:[#allocation2 + $0x30] sm:$0xff] %v1744
        %1777 = vst [vmem:[#allocation2 + $0x38] sm:$0xff] %v1745
        %1778 = vst [vmem:[#allocation2 + $0x40] sm:$0xff] %v1746
        %1779 = vst [vmem:[#allocation2 + $0x48] sm:$0xff] %v1747
        %1780 = vst [vmem:[#allocation2 + $0x50] sm:$0xff] %v1748
        %1781 = vst [vmem:[#allocation2 + $0x58] sm:$0xff] %v1749
        %1782 = vst [vmem:[#allocation2 + $0x60] sm:$0xff] %v1750
        %1783 = vst [vmem:[#allocation2 + $0x68] sm:$0xff] %v1751
        %1784 = vst [vmem:[#allocation2 + $0x70] sm:$0xff] %v1752
        %1785 = vst [vmem:[#allocation2 + $0x78] sm:$0xff] %v1753
        %1786 = vst [vmem:[#allocation2 + $0x80] sm:$0xff] %v1754
        %1787 = vst [vmem:[#allocation2 + $0x88] sm:$0xff] %v1755
        %1788 = vst [vmem:[#allocation2 + $0x90] sm:$0xff] %v1756
        %1789 = vst [vmem:[#allocation2 + $0x98] sm:$0xff] %v1757
        %1790 = vst [vmem:[#allocation2 + $0xa0] sm:$0xff] %v1758
        %1791 = vst [vmem:[#allocation2 + $0xa8] sm:$0xff] %v1759
        %1792 = vst [vmem:[#allocation2 + $0xb0] sm:$0xff] %v1760
        %1793 = vst [vmem:[#allocation2 + $0xb8] sm:$0xff] %v1761
        %1794 = vst [vmem:[#allocation2 + $0xc0] sm:$0xff] %v1762
        %1795 = vst [vmem:[#allocation2 + $0xc8] sm:$0xff] %v1763
        %1796 = vst [vmem:[#allocation2 + $0xd0] sm:$0xff] %v1764
        %1797 = vst [vmem:[#allocation2 + $0xd8] sm:$0xff] %v1765
        %1798 = vst [vmem:[#allocation2 + $0xe0] sm:$0xff] %v1766
        %1799 = vst [vmem:[#allocation2 + $0xe8] sm:$0xff] %v1767
        %1800 = vst [vmem:[#allocation2 + $0xf0] sm:$0xff] %v1768
        %1801 = vst [vmem:[#allocation2 + $0xf8] sm:$0xff] %v1769
        %p1802 = scmp.eq.s32.totalorder %s29, 1
        // Predicated region
        $region65: #{tpu_custom_call.1} parent=39 // pred_check
          %p1803 = pneg %p1802
        $region66: #{tpu_custom_call.1} parent=39 // pred_check_branch
          %1805 = sbr.rel (%p1803) target = $region68
        $region67: #{tpu_custom_call.1} parent=39 // pred_region
          %v1806 = vld [vmem:[#allocation2] sm:$0xff]
          %v1807 = vld [vmem:[#allocation2 + $0x8] sm:$0xff]
          %v1808 = vld [vmem:[#allocation2 + $0x10] sm:$0xff]
          %v1809 = vld [vmem:[#allocation2 + $0x18] sm:$0xff]
          %v1810 = vld [vmem:[#allocation2 + $0x20] sm:$0xff]
          %v1811 = vld [vmem:[#allocation2 + $0x28] sm:$0xff]
          %v1812 = vld [vmem:[#allocation2 + $0x30] sm:$0xff]
          %v1813 = vld [vmem:[#allocation2 + $0x38] sm:$0xff]
          %v1814 = vld [vmem:[#allocation2 + $0x40] sm:$0xff]
          %v1815 = vld [vmem:[#allocation2 + $0x48] sm:$0xff]
          %v1816 = vld [vmem:[#allocation2 + $0x50] sm:$0xff]
          %v1817 = vld [vmem:[#allocation2 + $0x58] sm:$0xff]
          %v1818 = vld [vmem:[#allocation2 + $0x60] sm:$0xff]
          %v1819 = vld [vmem:[#allocation2 + $0x68] sm:$0xff]
          %v1820 = vld [vmem:[#allocation2 + $0x70] sm:$0xff]
          %v1821 = vld [vmem:[#allocation2 + $0x78] sm:$0xff]
          %v1822 = vld [vmem:[#allocation2 + $0x80] sm:$0xff]
          %v1823 = vld [vmem:[#allocation2 + $0x88] sm:$0xff]
          %v1824 = vld [vmem:[#allocation2 + $0x90] sm:$0xff]
          %v1825 = vld [vmem:[#allocation2 + $0x98] sm:$0xff]
          %v1826 = vld [vmem:[#allocation2 + $0xa0] sm:$0xff]
          %v1827 = vld [vmem:[#allocation2 + $0xa8] sm:$0xff]
          %v1828 = vld [vmem:[#allocation2 + $0xb0] sm:$0xff]
          %v1829 = vld [vmem:[#allocation2 + $0xb8] sm:$0xff]
          %v1830 = vld [vmem:[#allocation2 + $0xc0] sm:$0xff]
          %v1831 = vld [vmem:[#allocation2 + $0xc8] sm:$0xff]
          %v1832 = vld [vmem:[#allocation2 + $0xd0] sm:$0xff]
          %v1833 = vld [vmem:[#allocation2 + $0xd8] sm:$0xff]
          %v1834 = vld [vmem:[#allocation2 + $0xe0] sm:$0xff]
          %v1835 = vld [vmem:[#allocation2 + $0xe8] sm:$0xff]
          %v1836 = vld [vmem:[#allocation2 + $0xf0] sm:$0xff]
          %v1837 = vld [vmem:[#allocation2 + $0xf8] sm:$0xff]
          %v1838 = vld [vmem:[#allocation11] sm:$0x3]
          %v1840 = vlaneseq
          %v1841 = vshrl.u32 %v1840, 7
          %v1842 = vsub.s32 0, %v1841
          %v1843 = vrot.slane %v1838, %v1842
          %v1844 = vlaneseq
          %v1845 = vshrl.u32 %v1844, 7
          %v1846 = vsub.s32 1, %v1845
          %v1847 = vrot.slane %v1838, %v1846
          %v1850 = vadd.f32 %v1806, %v1843
          %v1851 = vadd.f32 %v1807, %v1847
          %v1852 = vadd.f32 %v1808, %v1843
          %v1853 = vadd.f32 %v1809, %v1847
          %v1854 = vadd.f32 %v1810, %v1843
          %v1855 = vadd.f32 %v1811, %v1847
          %v1856 = vadd.f32 %v1812, %v1843
          %v1857 = vadd.f32 %v1813, %v1847
          %v1858 = vadd.f32 %v1814, %v1843
          %v1859 = vadd.f32 %v1815, %v1847
          %v1860 = vadd.f32 %v1816, %v1843
          %v1861 = vadd.f32 %v1817, %v1847
          %v1862 = vadd.f32 %v1818, %v1843
          %v1863 = vadd.f32 %v1819, %v1847
          %v1864 = vadd.f32 %v1820, %v1843
          %v1865 = vadd.f32 %v1821, %v1847
          %v1866 = vadd.f32 %v1822, %v1843
          %v1867 = vadd.f32 %v1823, %v1847
          %v1868 = vadd.f32 %v1824, %v1843
          %v1869 = vadd.f32 %v1825, %v1847
          %v1870 = vadd.f32 %v1826, %v1843
          %v1871 = vadd.f32 %v1827, %v1847
          %v1872 = vadd.f32 %v1828, %v1843
          %v1873 = vadd.f32 %v1829, %v1847
          %v1874 = vadd.f32 %v1830, %v1843
          %v1875 = vadd.f32 %v1831, %v1847
          %v1876 = vadd.f32 %v1832, %v1843
          %v1877 = vadd.f32 %v1833, %v1847
          %v1878 = vadd.f32 %v1834, %v1843
          %v1879 = vadd.f32 %v1835, %v1847
          %v1880 = vadd.f32 %v1836, %v1843
          %v1881 = vadd.f32 %v1837, %v1847
          %v1882 = vpack.c.bf16 %v1852, %v1850
          %v1883 = vpack.c.bf16 %v1853, %v1851
          %v1884 = vpack.c.bf16 %v1856, %v1854
          %v1885 = vpack.c.bf16 %v1857, %v1855
          %v1886 = vpack.c.bf16 %v1860, %v1858
          %v1887 = vpack.c.bf16 %v1861, %v1859
          %v1888 = vpack.c.bf16 %v1864, %v1862
          %v1889 = vpack.c.bf16 %v1865, %v1863
          %v1890 = vpack.c.bf16 %v1868, %v1866
          %v1891 = vpack.c.bf16 %v1869, %v1867
          %v1892 = vpack.c.bf16 %v1872, %v1870
          %v1893 = vpack.c.bf16 %v1873, %v1871
          %v1894 = vpack.c.bf16 %v1876, %v1874
          %v1895 = vpack.c.bf16 %v1877, %v1875
          %v1896 = vpack.c.bf16 %v1880, %v1878
          %v1897 = vpack.c.bf16 %v1881, %v1879
          %v1914 = vunpack.c.l.b16 %v1882
          %v1915 = vunpack.c.l.b16 %v1883
          %v1916 = vunpack.c.h.b16 %v1882
          %v1917 = vunpack.c.h.b16 %v1883
          %v1918 = vunpack.c.l.b16 %v1884
          %v1919 = vunpack.c.l.b16 %v1885
          %v1920 = vunpack.c.h.b16 %v1884
          %v1921 = vunpack.c.h.b16 %v1885
          %v1922 = vunpack.c.l.b16 %v1886
          %v1923 = vunpack.c.l.b16 %v1887
          %v1924 = vunpack.c.h.b16 %v1886
          %v1925 = vunpack.c.h.b16 %v1887
          %v1926 = vunpack.c.l.b16 %v1888
          %v1927 = vunpack.c.l.b16 %v1889
          %v1928 = vunpack.c.h.b16 %v1888
          %v1929 = vunpack.c.h.b16 %v1889
          %v1930 = vunpack.c.l.b16 %v1890
          %v1931 = vunpack.c.l.b16 %v1891
          %v1932 = vunpack.c.h.b16 %v1890
          %v1933 = vunpack.c.h.b16 %v1891
          %v1934 = vunpack.c.l.b16 %v1892
          %v1935 = vunpack.c.l.b16 %v1893
          %v1936 = vunpack.c.h.b16 %v1892
          %v1937 = vunpack.c.h.b16 %v1893
          %v1938 = vunpack.c.l.b16 %v1894
          %v1939 = vunpack.c.l.b16 %v1895
          %v1940 = vunpack.c.h.b16 %v1894
          %v1941 = vunpack.c.h.b16 %v1895
          %v1942 = vunpack.c.l.b16 %v1896
          %v1943 = vunpack.c.l.b16 %v1897
          %v1944 = vunpack.c.h.b16 %v1896
          %v1945 = vunpack.c.h.b16 %v1897
          %v1946 = vpack.c.b16 %v1915, %v1914
          %v1947 = vpack.c.b16 %v1917, %v1916
          %v1948 = vpack.c.b16 %v1919, %v1918
          %v1949 = vpack.c.b16 %v1921, %v1920
          %v1950 = vpack.c.b16 %v1923, %v1922
          %v1951 = vpack.c.b16 %v1925, %v1924
          %v1952 = vpack.c.b16 %v1927, %v1926
          %v1953 = vpack.c.b16 %v1929, %v1928
          %v1954 = vpack.c.b16 %v1931, %v1930
          %v1955 = vpack.c.b16 %v1933, %v1932
          %v1956 = vpack.c.b16 %v1935, %v1934
          %v1957 = vpack.c.b16 %v1937, %v1936
          %v1958 = vpack.c.b16 %v1939, %v1938
          %v1959 = vpack.c.b16 %v1941, %v1940
          %v1960 = vpack.c.b16 %v1943, %v1942
          %v1961 = vpack.c.b16 %v1945, %v1944
          %1978 = vst [vmem:[#allocation12] sm:$0xff] %v1946
          %1979 = vst [vmem:[#allocation12 + $0x8] sm:$0xff] %v1947
          %1980 = vst [vmem:[#allocation12 + $0x10] sm:$0xff] %v1948
          %1981 = vst [vmem:[#allocation12 + $0x18] sm:$0xff] %v1949
          %1982 = vst [vmem:[#allocation12 + $0x20] sm:$0xff] %v1950
          %1983 = vst [vmem:[#allocation12 + $0x28] sm:$0xff] %v1951
          %1984 = vst [vmem:[#allocation12 + $0x30] sm:$0xff] %v1952
          %1985 = vst [vmem:[#allocation12 + $0x38] sm:$0xff] %v1953
          %1986 = vst [vmem:[#allocation12 + $0x40] sm:$0xff] %v1954
          %1987 = vst [vmem:[#allocation12 + $0x48] sm:$0xff] %v1955
          %1988 = vst [vmem:[#allocation12 + $0x50] sm:$0xff] %v1956
          %1989 = vst [vmem:[#allocation12 + $0x58] sm:$0xff] %v1957
          %1990 = vst [vmem:[#allocation12 + $0x60] sm:$0xff] %v1958
          %1991 = vst [vmem:[#allocation12 + $0x68] sm:$0xff] %v1959
          %1992 = vst [vmem:[#allocation12 + $0x70] sm:$0xff] %v1960
          %1993 = vst [vmem:[#allocation12 + $0x78] sm:$0xff] %v1961
        $region68: #{tpu_custom_call.1} parent=39 // pred_fallthru
          _
        // Predicated region
        $region69: #{tpu_custom_call.1} parent=39 // pred_check
          %p1994 = pneg %p179
        $region70: #{tpu_custom_call.1} parent=39 // pred_check_branch
          %1996 = sbr.rel (%p1994) target = $region72
        $region71: #{tpu_custom_call.1} parent=39 // pred_region
          %s1997 = smul.u32 16, %s28
          %s1999 = ssub.s32 2048, 2048
          %2000 = vsyncadd [#allocation5], %s1999
          %s2001 = smul.addr %s1997, 2
          %s2002 = smul.addr %s2001, 64
          %s2003 = scalar_lea.hbm %s5, %s2002
          %s2004 = sshll.u32 [#allocation12], 4
          %s2005 = int_to_ptr.vmem [resolvable:$true] %s2004
          %2010 = dma.vmem_to_hbm [thread:$0]  %s2005, 2048, %s2003, [#allocation5], 128, 128, 8
        $region72: #{tpu_custom_call.1} parent=39 // pred_fallthru
          _
        // Predicated region
        $region73: #{tpu_custom_call.1} parent=39 // pred_check
          %p2011 = pneg %p179
        $region74: #{tpu_custom_call.1} parent=39 // pred_check_branch
          %2013 = sbr.rel (%p2011) target = $region76
        $region75: #{tpu_custom_call.1} parent=39 // pred_region
          %2014 = dma.done [#allocation5], 2048
        $region76: #{tpu_custom_call.1} parent=39 // pred_fallthru
          _
      $region40: #{tpu_custom_call.1} parent=5 // pred_fallthru
        _
      %p2015 = scmp.le.s32.totalorder 2, %s19
      // Predicated region
      $region77: #{tpu_custom_call.1} parent=5 // pred_check
        %p2016 = pneg %p2015
      $region78: #{tpu_custom_call.1} parent=5 // pred_check_branch
        %2018 = sbr.rel (%p2016) target = $region80
      $region79: #{tpu_custom_call.1} parent=5 // pred_region
        %s2019 = ssub.s32 %s19, 2
      $region80: #{tpu_custom_call.1} parent=5 // pred_fallthru
        _
    $region6: #{tpu_custom_call.1} parent=1 // loop_footer
      %s23 = sadd.s32 1, %s19
    $region7: #{tpu_custom_call.1} parent=1 // loop_footer_branch
      %18 = sbr.rel target = $region3
    $region8: #{tpu_custom_call.1} parent=1 // loop_exit
      _
    %2020 = vsyncpa [#allocation4], 1
    %s2021 = scalar_lea.sflag [#allocation4], 1
    %2022 = vsyncpa %s2021, 1
    %2023 = vsyncpa [#allocation7], 1
    %s2024 = scalar_lea.sflag [#allocation7], 1
    %2025 = vsyncpa %s2024, 1
    %2026 = vsyncpa [#allocation10], 1
    %s2027 = scalar_lea.sflag [#allocation10], 1
    %2028 = vsyncpa %s2027, 1
    %2029 = vsyncpa [#allocation5], 1
    %s2030 = scalar_lea.sflag [#allocation5], 1
    %2031 = vsyncpa %s2030, 1

</llo_original>
